<compile_context>
chip_gen: v7x
topology: tpu7x:2x2x1
jax: 0.10.0
libtpu: 0.0.40
codegen_flags: <defaults>
</compile_context>

<pallas_src>
import jax
import jax.numpy as jnp
from jax import lax
from jax.experimental import pallas as pl
from jax.experimental.pallas import tpu as pltpu


def _down_kernel(x_ref, w1_ref, b1_ref, w2_ref, b2_ref, o_ref,
                 pad1_ref, col1_ref, pad2_ref, col2_ref):
    # x_ref   : (1, Hp, 2, Wp, 2*Cin) f32 -- view of the NHWC input
    # w1_ref  : (9*Cin, Cmid)   bf16  (HWIO flattened, BN1 folded in)
    # b1_ref  : (1, Cmid)       f32
    # w2_ref  : (9*Cmid, Cout)  bf16  (BN2 folded in)
    # b2_ref  : (1, Cout)       f32
    # o_ref   : (1, Hp*Wp, Cout) f32
    # pad1_ref: (Hp+2, Wp+2, Cin)  f32  scratch (zero border + pooled interior)
    # col1_ref: (Hp*Wp, 9*Cin)     bf16 scratch (im2col for conv1)
    # pad2_ref: (Hp+2, Wp+2, Cmid) f32  scratch
    # col2_ref: (Hp*Wp, 9*Cmid)    bf16 scratch (im2col for conv2)
    Hp = x_ref.shape[1]
    Wp = x_ref.shape[3]
    Cin = x_ref.shape[4] // 2
    Cmid = w1_ref.shape[1]

    # ---- MaxPool2d(kernel=2, stride=2): max over the 4 taps of each window ----
    t00 = x_ref[0, :, 0, :, 0:Cin]
    t01 = x_ref[0, :, 0, :, Cin:2 * Cin]
    t10 = x_ref[0, :, 1, :, 0:Cin]
    t11 = x_ref[0, :, 1, :, Cin:2 * Cin]
    pooled = jnp.maximum(jnp.maximum(t00, t01), jnp.maximum(t10, t11))  # (Hp, Wp, Cin)

    # ---- zero only the 1-pixel border of the pad scratches (interior is fully
    #      overwritten each step, so no full-buffer re-zeroing) ----
    pad1_ref[0] = jnp.zeros((Wp + 2, Cin), jnp.float32)
    pad1_ref[Hp + 1] = jnp.zeros((Wp + 2, Cin), jnp.float32)
    pad1_ref[:, 0:1, :] = jnp.zeros((Hp + 2, 1, Cin), jnp.float32)
    pad1_ref[:, Wp + 1:Wp + 2, :] = jnp.zeros((Hp + 2, 1, Cin), jnp.float32)
    pad2_ref[0] = jnp.zeros((Wp + 2, Cmid), jnp.float32)
    pad2_ref[Hp + 1] = jnp.zeros((Wp + 2, Cmid), jnp.float32)
    pad2_ref[:, 0:1, :] = jnp.zeros((Hp + 2, 1, Cmid), jnp.float32)
    pad2_ref[:, Wp + 1:Wp + 2, :] = jnp.zeros((Hp + 2, 1, Cmid), jnp.float32)

    # ---- Conv1 3x3 (pad=1) + folded BN1 + ReLU: im2col + single MXU dot ----
    pad1_ref[1:Hp + 1, 1:Wp + 1, :] = pooled
    for k in range(9):
        ky, kx = k // 3, k % 3
        win = pad1_ref[ky:ky + Hp, kx:kx + Wp, :]                        # (Hp, Wp, Cin)
        col1_ref[:, k * Cin:(k + 1) * Cin] = (
            win.reshape(Hp * Wp, Cin).astype(jnp.bfloat16))
    acc1 = jnp.dot(col1_ref[...], w1_ref[...],
                   preferred_element_type=jnp.float32)                   # (Hp*Wp, Cmid)
    h1 = jnp.maximum(acc1 + b1_ref[...], 0.0)

    # ---- Conv2 3x3 (pad=1) + folded BN2 + ReLU ----
    pad2_ref[1:Hp + 1, 1:Wp + 1, :] = h1.reshape(Hp, Wp, Cmid)
    for k in range(9):
        ky, kx = k // 3, k % 3
        win = pad2_ref[ky:ky + Hp, kx:kx + Wp, :]                        # (Hp, Wp, Cmid)
        col2_ref[:, k * Cmid:(k + 1) * Cmid] = (
            win.reshape(Hp * Wp, Cmid).astype(jnp.bfloat16))
    acc2 = jnp.dot(col2_ref[...], w2_ref[...],
                   preferred_element_type=jnp.float32)                   # (Hp*Wp, Cout)
    h2 = jnp.maximum(acc2 + b2_ref[...], 0.0)

    o_ref[0] = h2.astype(o_ref.dtype)


def down_pallas(x_nchw, w1_hwio, b1, w2_hwio, b2):
    """x_nchw: (N, Cin, H, W) float32.  Returns (N, Cout, H//2, W//2) float32."""
    N, Cin, H, W = x_nchw.shape
    Hp, Wp = H // 2, W // 2
    Cmid = w1_hwio.shape[-1]
    Cout = w2_hwio.shape[-1]

    # PyTorch MaxPool2d(2) floors odd spatial dims.
    x_nchw = x_nchw[:, :, :2 * Hp, :2 * Wp]
    x = jnp.transpose(x_nchw, (0, 2, 3, 1)).astype(jnp.float32)          # NHWC
    # Free (metadata-only) view exposing the 2x2 pooling taps.
    x5 = x.reshape(N, Hp, 2, Wp, 2 * Cin)

    # Flatten HWIO weights to (9*C, Cout) matching the im2col column order; bf16 for MXU.
    w1_flat = w1_hwio.reshape(9 * Cin, Cmid).astype(jnp.bfloat16)
    w2_flat = w2_hwio.reshape(9 * Cmid, Cout).astype(jnp.bfloat16)
    b1_2d = b1.reshape(1, Cmid).astype(jnp.float32)
    b2_2d = b2.reshape(1, Cout).astype(jnp.float32)

    out = pl.pallas_call(
        _down_kernel,
        out_shape=jax.ShapeDtypeStruct((N, Hp * Wp, Cout), jnp.float32),
        grid_spec=pltpu.PrefetchScalarGridSpec(
            num_scalar_prefetch=0,
            grid=(N,),
            in_specs=[
                pl.BlockSpec((1, Hp, 2, Wp, 2 * Cin), lambda n: (n, 0, 0, 0, 0)),
                pl.BlockSpec((9 * Cin, Cmid), lambda n: (0, 0)),
                pl.BlockSpec((1, Cmid), lambda n: (0, 0)),
                pl.BlockSpec((9 * Cmid, Cout), lambda n: (0, 0)),
                pl.BlockSpec((1, Cout), lambda n: (0, 0)),
            ],
            out_specs=pl.BlockSpec((1, Hp * Wp, Cout), lambda n: (n, 0, 0)),
            scratch_shapes=[
                pltpu.VMEM((Hp + 2, Wp + 2, Cin), jnp.float32),
                pltpu.VMEM((Hp * Wp, 9 * Cin), jnp.bfloat16),
                pltpu.VMEM((Hp + 2, Wp + 2, Cmid), jnp.float32),
                pltpu.VMEM((Hp * Wp, 9 * Cmid), jnp.bfloat16),
            ],
        ),
        compiler_params=pltpu.CompilerParams(
            dimension_semantics=("parallel",),
            vmem_limit_bytes=48 * 1024 * 1024,
        ),
    )(x5, w1_flat, b1_2d, w2_flat, b2_2d)

    out = out.reshape(N, Hp, Wp, Cout)
    return jnp.transpose(out, (0, 3, 1, 2))                              # NCHW


# ----------------------------- parameter setup -------------------------------

def _fold_bn(w_oihw, b, gamma, beta, mean, var, eps=1e-5):
    """Fold eval-mode BatchNorm into the preceding conv.  Returns (HWIO weight, bias)."""
    scale = gamma / jnp.sqrt(var + eps)                 # (Cout,)
    w_f = w_oihw * scale[:, None, None, None]
    b_f = (b - mean) * scale + beta
    return jnp.transpose(w_f, (2, 3, 1, 0)), b_f        # OIHW -> HWIO


def init_down_params(key, in_channels, out_channels):
    ks = jax.random.split(key, 12)
    # Conv2d(in, out, 3, padding=1) + BatchNorm2d(out)
    w1 = jax.random.normal(ks[0], (out_channels, in_channels, 3, 3), jnp.float32) * 0.2
    c1b = jax.random.normal(ks[1], (out_channels,), jnp.float32) * 0.1
    g1 = 1.0 + 0.1 * jax.random.normal(ks[2], (out_channels,), jnp.float32)
    be1 = 0.1 * jax.random.normal(ks[3], (out_channels,), jnp.float32)
    m1 = 0.1 * jax.random.normal(ks[4], (out_channels,), jnp.float32)
    v1 = 0.5 + jax.random.uniform(ks[5], (out_channels,), jnp.float32)
    # Conv2d(out, out, 3, padding=1) + BatchNorm2d(out)
    w2 = jax.random.normal(ks[6], (out_channels, out_channels, 3, 3), jnp.float32) * 0.2
    c2b = jax.random.normal(ks[7], (out_channels,), jnp.float32) * 0.1
    g2 = 1.0 + 0.1 * jax.random.normal(ks[8], (out_channels,), jnp.float32)
    be2 = 0.1 * jax.random.normal(ks[9], (out_channels,), jnp.float32)
    m2 = 0.1 * jax.random.normal(ks[10], (out_channels,), jnp.float32)
    v2 = 0.5 + jax.random.uniform(ks[11], (out_channels,), jnp.float32)

    w1_hwio, b1 = _fold_bn(w1, c1b, g1, be1, m1, v1)
    w2_hwio, b2 = _fold_bn(w2, c2b, g2, be2, m2, v2)
    return w1_hwio, b1, w2_hwio, b2


# ------------------------------- pure-JAX ref ---------------------------------

def down_reference(x_nchw, w1_hwio, b1, w2_hwio, b2):
    N, Cin, H, W = x_nchw.shape
    Hp, Wp = H // 2, W // 2
    x = jnp.transpose(x_nchw[:, :, :2 * Hp, :2 * Wp], (0, 2, 3, 1))
    pooled = x.reshape(N, Hp, 2, Wp, 2, Cin).max(axis=(2, 4))
    dn1 = lax.conv_dimension_numbers(pooled.shape, w1_hwio.shape, ("NHWC", "HWIO", "NHWC"))
    h1 = lax.conv_general_dilated(pooled, w1_hwio, (1, 1), "SAME", dimension_numbers=dn1) + b1
    h1 = jnp.maximum(h1, 0.0)
    dn2 = lax.conv_dimension_numbers(h1.shape, w2_hwio.shape, ("NHWC", "HWIO", "NHWC"))
    h2 = lax.conv_general_dilated(h1, w2_hwio, (1, 1), "SAME", dimension_numbers=dn2) + b2
    h2 = jnp.maximum(h2, 0.0)
    return jnp.transpose(h2, (0, 3, 1, 2))


if __name__ == "__main__":
    key = jax.random.PRNGKey(0)
    k_x, k_p = jax.random.split(key)

    N, Cin, H, W = 2, 4, 16, 16
    Cout = 8

    x = jax.random.normal(k_x, (N, Cin, H, W), jnp.float32)
    w1_hwio, b1, w2_hwio, b2 = init_down_params(k_p, Cin, Cout)

    out = down_pallas(x, w1_hwio, b1, w2_hwio, b2)
    out = jax.block_until_ready(out)

    assert out.shape == (N, Cout, H // 2, W // 2), out.shape

    ref = down_reference(x, w1_hwio, b1, w2_hwio, b2)
    max_err = float(jnp.max(jnp.abs(out - ref)))
    scale = float(jnp.max(jnp.abs(ref))) + 1e-6
    # bf16 MXU operands (f32 accumulation) -> loosened relative tolerance.
    if max_err / scale > 5e-2:
        raise SystemExit(f"mismatch vs reference: max_err={max_err} (scale={scale})")

    print("KERNEL_OK")
</pallas_src>

<mosaic_0001>
module attributes {stable_mosaic.version = 11 : i64} {
  func.func @_down_kernel(%arg0: i32, %arg1: memref<1x8x2x8x8xf32, #tpu.memory_space<vmem>>, %arg2: memref<36x8xbf16, #tpu.memory_space<vmem>>, %arg3: memref<1x8xf32, #tpu.memory_space<vmem>>, %arg4: memref<72x8xbf16, #tpu.memory_space<vmem>>, %arg5: memref<1x8xf32, #tpu.memory_space<vmem>>, %arg6: memref<1x64x8xf32, #tpu.memory_space<vmem>>, %arg7: memref<10x10x4xf32, #tpu.memory_space<vmem>>, %arg8: memref<64x36xbf16, #tpu.memory_space<vmem>>, %arg9: memref<10x10x8xf32, #tpu.memory_space<vmem>>, %arg10: memref<64x72xbf16, #tpu.memory_space<vmem>>) attributes {dimension_semantics = [#tpu.dimension_semantics<parallel>], iteration_bounds = array<i64: 2>, scalar_prefetch = 0 : i64, scratch_operands = 4 : i64, tpu.core_type = #tpu.core_type<tc>, window_params = [{transform_indices = @transform_0, window_bounds = array<i64: 1, 8, 2, 8, 8>}, {pipeline_mode = #tpu.pipeline_mode<synchronous>, transform_indices = @transform_1, window_bounds = array<i64: 36, 8>}, {pipeline_mode = #tpu.pipeline_mode<synchronous>, transform_indices = @transform_2, window_bounds = array<i64: 1, 8>}, {pipeline_mode = #tpu.pipeline_mode<synchronous>, transform_indices = @transform_3, window_bounds = array<i64: 72, 8>}, {pipeline_mode = #tpu.pipeline_mode<synchronous>, transform_indices = @transform_4, window_bounds = array<i64: 1, 8>}, {transform_indices = @transform_5, window_bounds = array<i64: 1, 64, 8>}]} {
    %c0 = arith.constant 0 : index
    %c0_0 = arith.constant 0 : index
    %c0_1 = arith.constant 0 : index
    %c0_2 = arith.constant 0 : index
    %c0_3 = arith.constant 0 : index
    %0 = vector.load %arg1[%c0, %c0_0, %c0_1, %c0_2, %c0_3] : memref<1x8x2x8x8xf32, #tpu.memory_space<vmem>>, vector<1x8x1x8x4xf32>
    %1 = vector.shape_cast %0 : vector<1x8x1x8x4xf32> to vector<8x8x4xf32>
    %c0_4 = arith.constant 0 : index
    %c0_5 = arith.constant 0 : index
    %c0_6 = arith.constant 0 : index
    %c0_7 = arith.constant 0 : index
    %c4 = arith.constant 4 : index
    %2 = vector.load %arg1[%c0_4, %c0_5, %c0_6, %c0_7, %c4] : memref<1x8x2x8x8xf32, #tpu.memory_space<vmem>>, vector<1x8x1x8x4xf32>
    %3 = vector.shape_cast %2 : vector<1x8x1x8x4xf32> to vector<8x8x4xf32>
    %c0_8 = arith.constant 0 : index
    %c0_9 = arith.constant 0 : index
    %c1 = arith.constant 1 : index
    %c0_10 = arith.constant 0 : index
    %c0_11 = arith.constant 0 : index
    %4 = vector.load %arg1[%c0_8, %c0_9, %c1, %c0_10, %c0_11] : memref<1x8x2x8x8xf32, #tpu.memory_space<vmem>>, vector<1x8x1x8x4xf32>
    %5 = vector.shape_cast %4 : vector<1x8x1x8x4xf32> to vector<8x8x4xf32>
    %c0_12 = arith.constant 0 : index
    %c0_13 = arith.constant 0 : index
    %c1_14 = arith.constant 1 : index
    %c0_15 = arith.constant 0 : index
    %c4_16 = arith.constant 4 : index
    %6 = vector.load %arg1[%c0_12, %c0_13, %c1_14, %c0_15, %c4_16] : memref<1x8x2x8x8xf32, #tpu.memory_space<vmem>>, vector<1x8x1x8x4xf32>
    %7 = vector.shape_cast %6 : vector<1x8x1x8x4xf32> to vector<8x8x4xf32>
    %8 = arith.maximumf %1, %3 : vector<8x8x4xf32>
    %9 = arith.maximumf %5, %7 : vector<8x8x4xf32>
    %10 = arith.maximumf %8, %9 : vector<8x8x4xf32>
    %cst = arith.constant 0.000000e+00 : f32
    %11 = vector.broadcast %cst : f32 to vector<10x4xf32>
    %c0_17 = arith.constant 0 : index
    %c0_18 = arith.constant 0 : index
    %c0_19 = arith.constant 0 : index
    %12 = vector.load %arg7[%c0_17, %c0_18, %c0_19] : memref<10x10x4xf32, #tpu.memory_space<vmem>>, vector<1x10x4xf32>
    %13 = vector.shape_cast %12 : vector<1x10x4xf32> to vector<10x4xf32>
    %14 = vector.shape_cast %11 : vector<10x4xf32> to vector<1x10x4xf32>
    tpu.vector_store %arg7[%c0_17, %c0_18, %c0_19], %14 {strides = array<i32>} : memref<10x10x4xf32, #tpu.memory_space<vmem>>, vector<1x10x4xf32>,
    %cst_20 = arith.constant 0.000000e+00 : f32
    %15 = vector.broadcast %cst_20 : f32 to vector<10x4xf32>
    %c9 = arith.constant 9 : index
    %c0_21 = arith.constant 0 : index
    %c0_22 = arith.constant 0 : index
    %16 = vector.load %arg7[%c9, %c0_21, %c0_22] : memref<10x10x4xf32, #tpu.memory_space<vmem>>, vector<1x10x4xf32>
    %17 = vector.shape_cast %16 : vector<1x10x4xf32> to vector<10x4xf32>
    %18 = vector.shape_cast %15 : vector<10x4xf32> to vector<1x10x4xf32>
    tpu.vector_store %arg7[%c9, %c0_21, %c0_22], %18 {strides = array<i32>} : memref<10x10x4xf32, #tpu.memory_space<vmem>>, vector<1x10x4xf32>,
    %cst_23 = arith.constant 0.000000e+00 : f32
    %19 = vector.broadcast %cst_23 : f32 to vector<10x1x4xf32>
    %c0_24 = arith.constant 0 : index
    %c0_25 = arith.constant 0 : index
    %c0_26 = arith.constant 0 : index
    %20 = vector.load %arg7[%c0_24, %c0_25, %c0_26] : memref<10x10x4xf32, #tpu.memory_space<vmem>>, vector<10x1x4xf32>
    tpu.vector_store %arg7[%c0_24, %c0_25, %c0_26], %19 {strides = array<i32>} : memref<10x10x4xf32, #tpu.memory_space<vmem>>, vector<10x1x4xf32>,
    %cst_27 = arith.constant 0.000000e+00 : f32
    %21 = vector.broadcast %cst_27 : f32 to vector<10x1x4xf32>
    %c0_28 = arith.constant 0 : index
    %c9_29 = arith.constant 9 : index
    %c0_30 = arith.constant 0 : index
    %22 = vector.load %arg7[%c0_28, %c9_29, %c0_30] : memref<10x10x4xf32, #tpu.memory_space<vmem>>, vector<10x1x4xf32>
    tpu.vector_store %arg7[%c0_28, %c9_29, %c0_30], %21 {strides = array<i32>} : memref<10x10x4xf32, #tpu.memory_space<vmem>>, vector<10x1x4xf32>,
    %cst_31 = arith.constant 0.000000e+00 : f32
    %23 = vector.broadcast %cst_31 : f32 to vector<10x8xf32>
    %c0_32 = arith.constant 0 : index
    %c0_33 = arith.constant 0 : index
    %c0_34 = arith.constant 0 : index
    %24 = vector.load %arg9[%c0_32, %c0_33, %c0_34] : memref<10x10x8xf32, #tpu.memory_space<vmem>>, vector<1x10x8xf32>
    %25 = vector.shape_cast %24 : vector<1x10x8xf32> to vector<10x8xf32>
    %26 = vector.shape_cast %23 : vector<10x8xf32> to vector<1x10x8xf32>
    tpu.vector_store %arg9[%c0_32, %c0_33, %c0_34], %26 {strides = array<i32>} : memref<10x10x8xf32, #tpu.memory_space<vmem>>, vector<1x10x8xf32>,
    %cst_35 = arith.constant 0.000000e+00 : f32
    %27 = vector.broadcast %cst_35 : f32 to vector<10x8xf32>
    %c9_36 = arith.constant 9 : index
    %c0_37 = arith.constant 0 : index
    %c0_38 = arith.constant 0 : index
    %28 = vector.load %arg9[%c9_36, %c0_37, %c0_38] : memref<10x10x8xf32, #tpu.memory_space<vmem>>, vector<1x10x8xf32>
    %29 = vector.shape_cast %28 : vector<1x10x8xf32> to vector<10x8xf32>
    %30 = vector.shape_cast %27 : vector<10x8xf32> to vector<1x10x8xf32>
    tpu.vector_store %arg9[%c9_36, %c0_37, %c0_38], %30 {strides = array<i32>} : memref<10x10x8xf32, #tpu.memory_space<vmem>>, vector<1x10x8xf32>,
    %cst_39 = arith.constant 0.000000e+00 : f32
    %31 = vector.broadcast %cst_39 : f32 to vector<10x1x8xf32>
    %c0_40 = arith.constant 0 : index
    %c0_41 = arith.constant 0 : index
    %c0_42 = arith.constant 0 : index
    %32 = vector.load %arg9[%c0_40, %c0_41, %c0_42] : memref<10x10x8xf32, #tpu.memory_space<vmem>>, vector<10x1x8xf32>
    tpu.vector_store %arg9[%c0_40, %c0_41, %c0_42], %31 {strides = array<i32>} : memref<10x10x8xf32, #tpu.memory_space<vmem>>, vector<10x1x8xf32>,
    %cst_43 = arith.constant 0.000000e+00 : f32
    %33 = vector.broadcast %cst_43 : f32 to vector<10x1x8xf32>
    %c0_44 = arith.constant 0 : index
    %c9_45 = arith.constant 9 : index
    %c0_46 = arith.constant 0 : index
    %34 = vector.load %arg9[%c0_44, %c9_45, %c0_46] : memref<10x10x8xf32, #tpu.memory_space<vmem>>, vector<10x1x8xf32>
    tpu.vector_store %arg9[%c0_44, %c9_45, %c0_46], %33 {strides = array<i32>} : memref<10x10x8xf32, #tpu.memory_space<vmem>>, vector<10x1x8xf32>,
    %c1_47 = arith.constant 1 : index
    %c1_48 = arith.constant 1 : index
    %c0_49 = arith.constant 0 : index
    %35 = vector.load %arg7[%c1_47, %c1_48, %c0_49] : memref<10x10x4xf32, #tpu.memory_space<vmem>>, vector<8x8x4xf32>
    tpu.vector_store %arg7[%c1_47, %c1_48, %c0_49], %10 {strides = array<i32>} : memref<10x10x4xf32, #tpu.memory_space<vmem>>, vector<8x8x4xf32>,
    %c0_50 = arith.constant 0 : index
    %c0_51 = arith.constant 0 : index
    %c0_52 = arith.constant 0 : index
    %36 = vector.load %arg7[%c0_50, %c0_51, %c0_52] : memref<10x10x4xf32, #tpu.memory_space<vmem>>, vector<8x8x4xf32>
    %37 = vector.shape_cast %36 : vector<8x8x4xf32> to vector<64x4xf32>
    %38 = arith.truncf %37 : vector<64x4xf32> to vector<64x4xbf16>
    %c0_53 = arith.constant 0 : index
    %c0_54 = arith.constant 0 : index
    %39 = vector.load %arg8[%c0_53, %c0_54] : memref<64x36xbf16, #tpu.memory_space<vmem>>, vector<64x4xbf16>
    tpu.vector_store %arg8[%c0_53, %c0_54], %38 {strides = array<i32>} : memref<64x36xbf16, #tpu.memory_space<vmem>>, vector<64x4xbf16>,
    %c0_55 = arith.constant 0 : index
    %c1_56 = arith.constant 1 : index
    %c0_57 = arith.constant 0 : index
    %40 = vector.load %arg7[%c0_55, %c1_56, %c0_57] : memref<10x10x4xf32, #tpu.memory_space<vmem>>, vector<8x8x4xf32>
    %41 = vector.shape_cast %40 : vector<8x8x4xf32> to vector<64x4xf32>
    %42 = arith.truncf %41 : vector<64x4xf32> to vector<64x4xbf16>
    %c0_58 = arith.constant 0 : index
    %c4_59 = arith.constant 4 : index
    %43 = vector.load %arg8[%c0_58, %c4_59] : memref<64x36xbf16, #tpu.memory_space<vmem>>, vector<64x4xbf16>
    tpu.vector_store %arg8[%c0_58, %c4_59], %42 {strides = array<i32>} : memref<64x36xbf16, #tpu.memory_space<vmem>>, vector<64x4xbf16>,
    %c0_60 = arith.constant 0 : index
    %c2 = arith.constant 2 : index
    %c0_61 = arith.constant 0 : index
    %44 = vector.load %arg7[%c0_60, %c2, %c0_61] : memref<10x10x4xf32, #tpu.memory_space<vmem>>, vector<8x8x4xf32>
    %45 = vector.shape_cast %44 : vector<8x8x4xf32> to vector<64x4xf32>
    %46 = arith.truncf %45 : vector<64x4xf32> to vector<64x4xbf16>
    %c0_62 = arith.constant 0 : index
    %c8 = arith.constant 8 : index
    %47 = vector.load %arg8[%c0_62, %c8] : memref<64x36xbf16, #tpu.memory_space<vmem>>, vector<64x4xbf16>
    tpu.vector_store %arg8[%c0_62, %c8], %46 {strides = array<i32>} : memref<64x36xbf16, #tpu.memory_space<vmem>>, vector<64x4xbf16>,
    %c1_63 = arith.constant 1 : index
    %c0_64 = arith.constant 0 : index
    %c0_65 = arith.constant 0 : index
    %48 = vector.load %arg7[%c1_63, %c0_64, %c0_65] : memref<10x10x4xf32, #tpu.memory_space<vmem>>, vector<8x8x4xf32>
    %49 = vector.shape_cast %48 : vector<8x8x4xf32> to vector<64x4xf32>
    %50 = arith.truncf %49 : vector<64x4xf32> to vector<64x4xbf16>
    %c0_66 = arith.constant 0 : index
    %c12 = arith.constant 12 : index
    %51 = vector.load %arg8[%c0_66, %c12] : memref<64x36xbf16, #tpu.memory_space<vmem>>, vector<64x4xbf16>
    tpu.vector_store %arg8[%c0_66, %c12], %50 {strides = array<i32>} : memref<64x36xbf16, #tpu.memory_space<vmem>>, vector<64x4xbf16>,
    %c1_67 = arith.constant 1 : index
    %c1_68 = arith.constant 1 : index
    %c0_69 = arith.constant 0 : index
    %52 = vector.load %arg7[%c1_67, %c1_68, %c0_69] : memref<10x10x4xf32, #tpu.memory_space<vmem>>, vector<8x8x4xf32>
    %53 = vector.shape_cast %52 : vector<8x8x4xf32> to vector<64x4xf32>
    %54 = arith.truncf %53 : vector<64x4xf32> to vector<64x4xbf16>
    %c0_70 = arith.constant 0 : index
    %c16 = arith.constant 16 : index
    %55 = vector.load %arg8[%c0_70, %c16] : memref<64x36xbf16, #tpu.memory_space<vmem>>, vector<64x4xbf16>
    tpu.vector_store %arg8[%c0_70, %c16], %54 {strides = array<i32>} : memref<64x36xbf16, #tpu.memory_space<vmem>>, vector<64x4xbf16>,
    %c1_71 = arith.constant 1 : index
    %c2_72 = arith.constant 2 : index
    %c0_73 = arith.constant 0 : index
    %56 = vector.load %arg7[%c1_71, %c2_72, %c0_73] : memref<10x10x4xf32, #tpu.memory_space<vmem>>, vector<8x8x4xf32>
    %57 = vector.shape_cast %56 : vector<8x8x4xf32> to vector<64x4xf32>
    %58 = arith.truncf %57 : vector<64x4xf32> to vector<64x4xbf16>
    %c0_74 = arith.constant 0 : index
    %c20 = arith.constant 20 : index
    %59 = vector.load %arg8[%c0_74, %c20] : memref<64x36xbf16, #tpu.memory_space<vmem>>, vector<64x4xbf16>
    tpu.vector_store %arg8[%c0_74, %c20], %58 {strides = array<i32>} : memref<64x36xbf16, #tpu.memory_space<vmem>>, vector<64x4xbf16>,
    %c2_75 = arith.constant 2 : index
    %c0_76 = arith.constant 0 : index
    %c0_77 = arith.constant 0 : index
    %60 = vector.load %arg7[%c2_75, %c0_76, %c0_77] : memref<10x10x4xf32, #tpu.memory_space<vmem>>, vector<8x8x4xf32>
    %61 = vector.shape_cast %60 : vector<8x8x4xf32> to vector<64x4xf32>
    %62 = arith.truncf %61 : vector<64x4xf32> to vector<64x4xbf16>
    %c0_78 = arith.constant 0 : index
    %c24 = arith.constant 24 : index
    %63 = vector.load %arg8[%c0_78, %c24] : memref<64x36xbf16, #tpu.memory_space<vmem>>, vector<64x4xbf16>
    tpu.vector_store %arg8[%c0_78, %c24], %62 {strides = array<i32>} : memref<64x36xbf16, #tpu.memory_space<vmem>>, vector<64x4xbf16>,
    %c2_79 = arith.constant 2 : index
    %c1_80 = arith.constant 1 : index
    %c0_81 = arith.constant 0 : index
    %64 = vector.load %arg7[%c2_79, %c1_80, %c0_81] : memref<10x10x4xf32, #tpu.memory_space<vmem>>, vector<8x8x4xf32>
    %65 = vector.shape_cast %64 : vector<8x8x4xf32> to vector<64x4xf32>
    %66 = arith.truncf %65 : vector<64x4xf32> to vector<64x4xbf16>
    %c0_82 = arith.constant 0 : index
    %c28 = arith.constant 28 : index
    %67 = vector.load %arg8[%c0_82, %c28] : memref<64x36xbf16, #tpu.memory_space<vmem>>, vector<64x4xbf16>
    tpu.vector_store %arg8[%c0_82, %c28], %66 {strides = array<i32>} : memref<64x36xbf16, #tpu.memory_space<vmem>>, vector<64x4xbf16>,
    %c2_83 = arith.constant 2 : index
    %c2_84 = arith.constant 2 : index
    %c0_85 = arith.constant 0 : index
    %68 = vector.load %arg7[%c2_83, %c2_84, %c0_85] : memref<10x10x4xf32, #tpu.memory_space<vmem>>, vector<8x8x4xf32>
    %69 = vector.shape_cast %68 : vector<8x8x4xf32> to vector<64x4xf32>
    %70 = arith.truncf %69 : vector<64x4xf32> to vector<64x4xbf16>
    %c0_86 = arith.constant 0 : index
    %c32 = arith.constant 32 : index
    %71 = vector.load %arg8[%c0_86, %c32] : memref<64x36xbf16, #tpu.memory_space<vmem>>, vector<64x4xbf16>
    tpu.vector_store %arg8[%c0_86, %c32], %70 {strides = array<i32>} : memref<64x36xbf16, #tpu.memory_space<vmem>>, vector<64x4xbf16>,
    %c0_87 = arith.constant 0 : index
    %c0_88 = arith.constant 0 : index
    %72 = vector.load %arg8[%c0_87, %c0_88] : memref<64x36xbf16, #tpu.memory_space<vmem>>, vector<64x36xbf16>
    %c0_89 = arith.constant 0 : index
    %c0_90 = arith.constant 0 : index
    %73 = vector.load %arg2[%c0_89, %c0_90] : memref<36x8xbf16, #tpu.memory_space<vmem>>, vector<36x8xbf16>
    %cst_91 = arith.constant dense<0.000000e+00> : vector<64x8xf32>
    %74 = tpu.matmul %72, %73, %cst_91 {dimension_numbers = #tpu.dot_dimension_numbers<[1], [0], [0], [1], [0, 0, 1, 1], [], []>} : vector<64x36xbf16>, vector<36x8xbf16>, vector<64x8xf32> -> vector<64x8xf32>
    %c0_92 = arith.constant 0 : index
    %c0_93 = arith.constant 0 : index
    %75 = vector.load %arg3[%c0_92, %c0_93] : memref<1x8xf32, #tpu.memory_space<vmem>>, vector<1x8xf32>
    %76 = vector.broadcast %75 : vector<1x8xf32> to vector<64x8xf32>
    %77 = arith.addf %74, %76 : vector<64x8xf32>
    %cst_94 = arith.constant 0.000000e+00 : f32
    %78 = vector.broadcast %cst_94 : f32 to vector<64x8xf32>
    %79 = arith.maximumf %77, %78 : vector<64x8xf32>
    %80 = vector.shape_cast %79 : vector<64x8xf32> to vector<8x8x8xf32>
    %c1_95 = arith.constant 1 : index
    %c1_96 = arith.constant 1 : index
    %c0_97 = arith.constant 0 : index
    %81 = vector.load %arg9[%c1_95, %c1_96, %c0_97] : memref<10x10x8xf32, #tpu.memory_space<vmem>>, vector<8x8x8xf32>
    tpu.vector_store %arg9[%c1_95, %c1_96, %c0_97], %80 {strides = array<i32>} : memref<10x10x8xf32, #tpu.memory_space<vmem>>, vector<8x8x8xf32>,
    %c0_98 = arith.constant 0 : index
    %c0_99 = arith.constant 0 : index
    %c0_100 = arith.constant 0 : index
    %82 = vector.load %arg9[%c0_98, %c0_99, %c0_100] : memref<10x10x8xf32, #tpu.memory_space<vmem>>, vector<8x8x8xf32>
    %83 = vector.shape_cast %82 : vector<8x8x8xf32> to vector<64x8xf32>
    %84 = arith.truncf %83 : vector<64x8xf32> to vector<64x8xbf16>
    %c0_101 = arith.constant 0 : index
    %c0_102 = arith.constant 0 : index
    %85 = vector.load %arg10[%c0_101, %c0_102] : memref<64x72xbf16, #tpu.memory_space<vmem>>, vector<64x8xbf16>
    tpu.vector_store %arg10[%c0_101, %c0_102], %84 {strides = array<i32>} : memref<64x72xbf16, #tpu.memory_space<vmem>>, vector<64x8xbf16>,
    %c0_103 = arith.constant 0 : index
    %c1_104 = arith.constant 1 : index
    %c0_105 = arith.constant 0 : index
    %86 = vector.load %arg9[%c0_103, %c1_104, %c0_105] : memref<10x10x8xf32, #tpu.memory_space<vmem>>, vector<8x8x8xf32>
    %87 = vector.shape_cast %86 : vector<8x8x8xf32> to vector<64x8xf32>
    %88 = arith.truncf %87 : vector<64x8xf32> to vector<64x8xbf16>
    %c0_106 = arith.constant 0 : index
    %c8_107 = arith.constant 8 : index
    %89 = vector.load %arg10[%c0_106, %c8_107] : memref<64x72xbf16, #tpu.memory_space<vmem>>, vector<64x8xbf16>
    tpu.vector_store %arg10[%c0_106, %c8_107], %88 {strides = array<i32>} : memref<64x72xbf16, #tpu.memory_space<vmem>>, vector<64x8xbf16>,
    %c0_108 = arith.constant 0 : index
    %c2_109 = arith.constant 2 : index
    %c0_110 = arith.constant 0 : index
    %90 = vector.load %arg9[%c0_108, %c2_109, %c0_110] : memref<10x10x8xf32, #tpu.memory_space<vmem>>, vector<8x8x8xf32>
    %91 = vector.shape_cast %90 : vector<8x8x8xf32> to vector<64x8xf32>
    %92 = arith.truncf %91 : vector<64x8xf32> to vector<64x8xbf16>
    %c0_111 = arith.constant 0 : index
    %c16_112 = arith.constant 16 : index
    %93 = vector.load %arg10[%c0_111, %c16_112] : memref<64x72xbf16, #tpu.memory_space<vmem>>, vector<64x8xbf16>
    tpu.vector_store %arg10[%c0_111, %c16_112], %92 {strides = array<i32>} : memref<64x72xbf16, #tpu.memory_space<vmem>>, vector<64x8xbf16>,
    %c1_113 = arith.constant 1 : index
    %c0_114 = arith.constant 0 : index
    %c0_115 = arith.constant 0 : index
    %94 = vector.load %arg9[%c1_113, %c0_114, %c0_115] : memref<10x10x8xf32, #tpu.memory_space<vmem>>, vector<8x8x8xf32>
    %95 = vector.shape_cast %94 : vector<8x8x8xf32> to vector<64x8xf32>
    %96 = arith.truncf %95 : vector<64x8xf32> to vector<64x8xbf16>
    %c0_116 = arith.constant 0 : index
    %c24_117 = arith.constant 24 : index
    %97 = vector.load %arg10[%c0_116, %c24_117] : memref<64x72xbf16, #tpu.memory_space<vmem>>, vector<64x8xbf16>
    tpu.vector_store %arg10[%c0_116, %c24_117], %96 {strides = array<i32>} : memref<64x72xbf16, #tpu.memory_space<vmem>>, vector<64x8xbf16>,
    %c1_118 = arith.constant 1 : index
    %c1_119 = arith.constant 1 : index
    %c0_120 = arith.constant 0 : index
    %98 = vector.load %arg9[%c1_118, %c1_119, %c0_120] : memref<10x10x8xf32, #tpu.memory_space<vmem>>, vector<8x8x8xf32>
    %99 = vector.shape_cast %98 : vector<8x8x8xf32> to vector<64x8xf32>
    %100 = arith.truncf %99 : vector<64x8xf32> to vector<64x8xbf16>
    %c0_121 = arith.constant 0 : index
    %c32_122 = arith.constant 32 : index
    %101 = vector.load %arg10[%c0_121, %c32_122] : memref<64x72xbf16, #tpu.memory_space<vmem>>, vector<64x8xbf16>
    tpu.vector_store %arg10[%c0_121, %c32_122], %100 {strides = array<i32>} : memref<64x72xbf16, #tpu.memory_space<vmem>>, vector<64x8xbf16>,
    %c1_123 = arith.constant 1 : index
    %c2_124 = arith.constant 2 : index
    %c0_125 = arith.constant 0 : index
    %102 = vector.load %arg9[%c1_123, %c2_124, %c0_125] : memref<10x10x8xf32, #tpu.memory_space<vmem>>, vector<8x8x8xf32>
    %103 = vector.shape_cast %102 : vector<8x8x8xf32> to vector<64x8xf32>
    %104 = arith.truncf %103 : vector<64x8xf32> to vector<64x8xbf16>
    %c0_126 = arith.constant 0 : index
    %c40 = arith.constant 40 : index
    %105 = vector.load %arg10[%c0_126, %c40] : memref<64x72xbf16, #tpu.memory_space<vmem>>, vector<64x8xbf16>
    tpu.vector_store %arg10[%c0_126, %c40], %104 {strides = array<i32>} : memref<64x72xbf16, #tpu.memory_space<vmem>>, vector<64x8xbf16>,
    %c2_127 = arith.constant 2 : index
    %c0_128 = arith.constant 0 : index
    %c0_129 = arith.constant 0 : index
    %106 = vector.load %arg9[%c2_127, %c0_128, %c0_129] : memref<10x10x8xf32, #tpu.memory_space<vmem>>, vector<8x8x8xf32>
    %107 = vector.shape_cast %106 : vector<8x8x8xf32> to vector<64x8xf32>
    %108 = arith.truncf %107 : vector<64x8xf32> to vector<64x8xbf16>
    %c0_130 = arith.constant 0 : index
    %c48 = arith.constant 48 : index
    %109 = vector.load %arg10[%c0_130, %c48] : memref<64x72xbf16, #tpu.memory_space<vmem>>, vector<64x8xbf16>
    tpu.vector_store %arg10[%c0_130, %c48], %108 {strides = array<i32>} : memref<64x72xbf16, #tpu.memory_space<vmem>>, vector<64x8xbf16>,
    %c2_131 = arith.constant 2 : index
    %c1_132 = arith.constant 1 : index
    %c0_133 = arith.constant 0 : index
    %110 = vector.load %arg9[%c2_131, %c1_132, %c0_133] : memref<10x10x8xf32, #tpu.memory_space<vmem>>, vector<8x8x8xf32>
    %111 = vector.shape_cast %110 : vector<8x8x8xf32> to vector<64x8xf32>
    %112 = arith.truncf %111 : vector<64x8xf32> to vector<64x8xbf16>
    %c0_134 = arith.constant 0 : index
    %c56 = arith.constant 56 : index
    %113 = vector.load %arg10[%c0_134, %c56] : memref<64x72xbf16, #tpu.memory_space<vmem>>, vector<64x8xbf16>
    tpu.vector_store %arg10[%c0_134, %c56], %112 {strides = array<i32>} : memref<64x72xbf16, #tpu.memory_space<vmem>>, vector<64x8xbf16>,
    %c2_135 = arith.constant 2 : index
    %c2_136 = arith.constant 2 : index
    %c0_137 = arith.constant 0 : index
    %114 = vector.load %arg9[%c2_135, %c2_136, %c0_137] : memref<10x10x8xf32, #tpu.memory_space<vmem>>, vector<8x8x8xf32>
    %115 = vector.shape_cast %114 : vector<8x8x8xf32> to vector<64x8xf32>
    %116 = arith.truncf %115 : vector<64x8xf32> to vector<64x8xbf16>
    %c0_138 = arith.constant 0 : index
    %c64 = arith.constant 64 : index
    %117 = vector.load %arg10[%c0_138, %c64] : memref<64x72xbf16, #tpu.memory_space<vmem>>, vector<64x8xbf16>
    tpu.vector_store %arg10[%c0_138, %c64], %116 {strides = array<i32>} : memref<64x72xbf16, #tpu.memory_space<vmem>>, vector<64x8xbf16>,
    %c0_139 = arith.constant 0 : index
    %c0_140 = arith.constant 0 : index
    %118 = vector.load %arg10[%c0_139, %c0_140] : memref<64x72xbf16, #tpu.memory_space<vmem>>, vector<64x72xbf16>
    %c0_141 = arith.constant 0 : index
    %c0_142 = arith.constant 0 : index
    %119 = vector.load %arg4[%c0_141, %c0_142] : memref<72x8xbf16, #tpu.memory_space<vmem>>, vector<72x8xbf16>
    %cst_143 = arith.constant dense<0.000000e+00> : vector<64x8xf32>
    %120 = tpu.matmul %118, %119, %cst_143 {dimension_numbers = #tpu.dot_dimension_numbers<[1], [0], [0], [1], [0, 0, 1, 1], [], []>} : vector<64x72xbf16>, vector<72x8xbf16>, vector<64x8xf32> -> vector<64x8xf32>
    %c0_144 = arith.constant 0 : index
    %c0_145 = arith.constant 0 : index
    %121 = vector.load %arg5[%c0_144, %c0_145] : memref<1x8xf32, #tpu.memory_space<vmem>>, vector<1x8xf32>
    %122 = vector.broadcast %121 : vector<1x8xf32> to vector<64x8xf32>
    %123 = arith.addf %120, %122 : vector<64x8xf32>
    %cst_146 = arith.constant 0.000000e+00 : f32
    %124 = vector.broadcast %cst_146 : f32 to vector<64x8xf32>
    %125 = arith.maximumf %123, %124 : vector<64x8xf32>
    %c0_147 = arith.constant 0 : index
    %c0_148 = arith.constant 0 : index
    %c0_149 = arith.constant 0 : index
    %126 = vector.load %arg6[%c0_147, %c0_148, %c0_149] : memref<1x64x8xf32, #tpu.memory_space<vmem>>, vector<1x64x8xf32>
    %127 = vector.shape_cast %126 : vector<1x64x8xf32> to vector<64x8xf32>
    %128 = vector.shape_cast %125 : vector<64x8xf32> to vector<1x64x8xf32>
    tpu.vector_store %arg6[%c0_147, %c0_148, %c0_149], %128 {strides = array<i32>} : memref<1x64x8xf32, #tpu.memory_space<vmem>>, vector<1x64x8xf32>,
    return
  }
  func.func @transform_0(%arg0: i32) -> (i32, i32, i32, i32, i32) {
    %c0_i32 = arith.constant 0 : i32
    %c0_i32_0 = arith.constant 0 : i32
    %c0_i32_1 = arith.constant 0 : i32
    %c0_i32_2 = arith.constant 0 : i32
    %c0_i32_3 = arith.constant 0 : i32
    return %arg0, %c0_i32, %c0_i32_0, %c0_i32_1, %c0_i32_2 : i32, i32, i32, i32, i32
  }
  func.func @transform_1(%arg0: i32) -> (i32, i32) {
    %c0_i32 = arith.constant 0 : i32
    %c0_i32_0 = arith.constant 0 : i32
    %c0_i32_1 = arith.constant 0 : i32
    return %c0_i32, %c0_i32_0 : i32, i32
  }
  func.func @transform_2(%arg0: i32) -> (i32, i32) {
    %c0_i32 = arith.constant 0 : i32
    %c0_i32_0 = arith.constant 0 : i32
    %c0_i32_1 = arith.constant 0 : i32
    return %c0_i32, %c0_i32_0 : i32, i32
  }
  func.func @transform_3(%arg0: i32) -> (i32, i32) {
    %c0_i32 = arith.constant 0 : i32
    %c0_i32_0 = arith.constant 0 : i32
    %c0_i32_1 = arith.constant 0 : i32
    return %c0_i32, %c0_i32_0 : i32, i32
  }
  func.func @transform_4(%arg0: i32) -> (i32, i32) {
    %c0_i32 = arith.constant 0 : i32
    %c0_i32_0 = arith.constant 0 : i32
    %c0_i32_1 = arith.constant 0 : i32
    return %c0_i32, %c0_i32_0 : i32, i32
  }
  func.func @transform_5(%arg0: i32) -> (i32, i32, i32) {
    %c0_i32 = arith.constant 0 : i32
    %c0_i32_0 = arith.constant 0 : i32
    %c0_i32_1 = arith.constant 0 : i32
    return %arg0, %c0_i32, %c0_i32_0 : i32, i32, i32
  }
}

</mosaic_0001>

<llo_original>
// kernel: tpu_custom_call.1
$region0: #{tpu_custom_call.1}
  #allocation0 [shape = 'u32[]', space=smem, size = 0x4, offset = 0x4, fixed_abs, tag = 'smem constant byte address 0x4 - core index']
  #allocation1 [shape = 'u32[144,128]{1,0:T(1,128)}', space=vmem, size = 0x12000, scoped, tag = 'internal scratch']
  #allocation2 [shape = 'f32[10,10,4]{2,1,0:T(8,128)}', space=vmem, size = 0x14000, scoped, tag = 'scratch operand']
  #allocation3 [shape = 'bf16[64,36]{1,0:T(16,128)(2,1)}', space=vmem, size = 0x4000, scoped, tag = 'scratch operand']
  #allocation4 [shape = 'f32[10,10,8]{2,1,0:T(8,128)}', space=vmem, size = 0x14000, scoped, tag = 'scratch operand']
  #allocation5 [shape = 'bf16[64,72]{1,0:T(16,128)(2,1)}', space=vmem, size = 0x4000, scoped, tag = 'scratch operand']
  %s0 = inlined_call_operand.hbm [shape: f32[2,8,2,8,8], index: 0, kind: input, shape index: {}]
  %s1 = inlined_call_operand.vmem [shape: bf16[36,8], index: 1, kind: input, shape index: {}]
  %s2 = inlined_call_operand.vmem [shape: f32[1,8], index: 2, kind: input, shape index: {}]
  %s3 = inlined_call_operand.vmem [shape: bf16[72,8], index: 3, kind: input, shape index: {}]
  %s4 = inlined_call_operand.vmem [shape: f32[1,8], index: 4, kind: input, shape index: {}]
  %s5 = inlined_call_operand.vmem [shape: f32[2,64,8], index: 5, kind: output, shape index: {}]
  %s6 = sld [smem:[#allocation0]]
  $region57: #{tpu_custom_call.1} parent=0
    _
  %s8 = ssub.s32 1, %s6
  %s9 = scalar_select 0, %s8, %s6
  $region1: #{tpu_custom_call.1} parent=0
    #allocation6 [shape = 'u8[131072]{0}', space=vmem, size = 0x20000, scoped, tag = 'input window, operand 0']
    #allocation7 [shape = 's32[2]{0}', space=sflag, size = 0x8, scoped, tag = 'scoped memory for tpu_custom_call.1']
    %10 = vsyncpa [#allocation7], 0
    %s11 = scalar_lea.sflag [#allocation7], 1
    %12 = vsyncpa %s11, 0
    loop: start=0, step=1, limit=4
    $region2: #{tpu_custom_call.1} parent=1 // loop_pre_header
      _
    $region3: #{tpu_custom_call.1} parent=1 // loop_header
      %s14 = sphi 0, %s18
      %p15 = scmp.ge.s32.totalorder %s14, 4
      %s24 = sphi 0, %s26
      %s27 = sphi 0, %s24
      %s28 = sphi 0, %s27
      %s44 = sphi 0, %s28
      %s48 = sphi 0, %s48
      %s50 = sphi 0, %s48
      %s51 = sphi 0, %s50
      %s65 = sphi 0, %s51
      %s69 = sphi 0, %s69
      %s71 = sphi 0, %s69
      %s72 = sphi 0, %s71
      %s86 = sphi 0, %s72
      %s90 = sphi 0, %s90
      %s92 = sphi 0, %s90
      %s93 = sphi 0, %s92
      %s107 = sphi 0, %s93
      %s111 = sphi 0, %s111
      %s113 = sphi 0, %s111
      %s114 = sphi 0, %s113
      %s128 = sphi 0, %s114
      %s134 = sphi 0, %s136
      %s137 = sphi 0, %s134
      %s138 = sphi 0, %s137
      %s154 = sphi 0, %s138
    $region4: #{tpu_custom_call.1} parent=1 // loop_header_branch
      %17 = sbr.rel (%p15) target = $region8
    $region5: #{tpu_custom_call.1} parent=1 // loop_body
      %s19 = ssub.s32 %s14, 1
      %s20 = ssub.s32 %s14, 2
      %s21 = sadd.s32 %s14, 1
      %s22 = ssub.s32 %s14, %s21
      %p23 = scmp.eq.s32.totalorder %s22, 0
      %s25 = sadd.s32 %s24, 1
      %s26 = scalar_select %p23, %s24, %s25
      %p29 = pneg %p23
      %p30 = scmp.eq.s32.totalorder %s14, 1
      %p31 = por %p29, %p30
      %p32 = scmp.ne.s32.totalorder %s24, %s27
      %p33 = scmp.eq.s32.totalorder %s14, 0
      %p34 = por %p32, %p33
      %p35 = scmp.ne.s32.totalorder %s24, %s27
      %p36 = scmp.eq.s32.totalorder %s19, 1
      %p37 = por %p35, %p36
      %p38 = scmp.ne.s32.totalorder %s27, %s28
      %p39 = scmp.eq.s32.totalorder %s19, 0
      %p40 = por %p38, %p39
      %p41 = scmp.ne.s32.totalorder %s27, %s28
      %p42 = scmp.eq.s32.totalorder %s20, 1
      %p43 = por %p41, %p42
      %p45 = scmp.ne.s32.totalorder %s28, %s44
      %p46 = scmp.eq.s32.totalorder %s20, 0
      %p47 = por %p45, %p46
      %s49 = sadd.s32 %s48, 1
      %p52 = scmp.eq.s32.totalorder %s14, 1
      %p53 = scmp.ne.s32.totalorder %s48, %s50
      %p54 = scmp.eq.s32.totalorder %s14, 0
      %p55 = por %p53, %p54
      %p56 = scmp.ne.s32.totalorder %s48, %s50
      %p57 = scmp.eq.s32.totalorder %s19, 1
      %p58 = por %p56, %p57
      %p59 = scmp.ne.s32.totalorder %s50, %s51
      %p60 = scmp.eq.s32.totalorder %s19, 0
      %p61 = por %p59, %p60
      %p62 = scmp.ne.s32.totalorder %s50, %s51
      %p63 = scmp.eq.s32.totalorder %s20, 1
      %p64 = por %p62, %p63
      %p66 = scmp.ne.s32.totalorder %s51, %s65
      %p67 = scmp.eq.s32.totalorder %s20, 0
      %p68 = por %p66, %p67
      %s70 = sadd.s32 %s69, 1
      %p73 = scmp.eq.s32.totalorder %s14, 1
      %p74 = scmp.ne.s32.totalorder %s69, %s71
      %p75 = scmp.eq.s32.totalorder %s14, 0
      %p76 = por %p74, %p75
      %p77 = scmp.ne.s32.totalorder %s69, %s71
      %p78 = scmp.eq.s32.totalorder %s19, 1
      %p79 = por %p77, %p78
      %p80 = scmp.ne.s32.totalorder %s71, %s72
      %p81 = scmp.eq.s32.totalorder %s19, 0
      %p82 = por %p80, %p81
      %p83 = scmp.ne.s32.totalorder %s71, %s72
      %p84 = scmp.eq.s32.totalorder %s20, 1
      %p85 = por %p83, %p84
      %p87 = scmp.ne.s32.totalorder %s72, %s86
      %p88 = scmp.eq.s32.totalorder %s20, 0
      %p89 = por %p87, %p88
      %s91 = sadd.s32 %s90, 1
      %p94 = scmp.eq.s32.totalorder %s14, 1
      %p95 = scmp.ne.s32.totalorder %s90, %s92
      %p96 = scmp.eq.s32.totalorder %s14, 0
      %p97 = por %p95, %p96
      %p98 = scmp.ne.s32.totalorder %s90, %s92
      %p99 = scmp.eq.s32.totalorder %s19, 1
      %p100 = por %p98, %p99
      %p101 = scmp.ne.s32.totalorder %s92, %s93
      %p102 = scmp.eq.s32.totalorder %s19, 0
      %p103 = por %p101, %p102
      %p104 = scmp.ne.s32.totalorder %s92, %s93
      %p105 = scmp.eq.s32.totalorder %s20, 1
      %p106 = por %p104, %p105
      %p108 = scmp.ne.s32.totalorder %s93, %s107
      %p109 = scmp.eq.s32.totalorder %s20, 0
      %p110 = por %p108, %p109
      %s112 = sadd.s32 %s111, 1
      %p115 = scmp.eq.s32.totalorder %s14, 1
      %p116 = scmp.ne.s32.totalorder %s111, %s113
      %p117 = scmp.eq.s32.totalorder %s14, 0
      %p118 = por %p116, %p117
      %p119 = scmp.ne.s32.totalorder %s111, %s113
      %p120 = scmp.eq.s32.totalorder %s19, 1
      %p121 = por %p119, %p120
      %p122 = scmp.ne.s32.totalorder %s113, %s114
      %p123 = scmp.eq.s32.totalorder %s19, 0
      %p124 = por %p122, %p123
      %p125 = scmp.ne.s32.totalorder %s113, %s114
      %p126 = scmp.eq.s32.totalorder %s20, 1
      %p127 = por %p125, %p126
      %p129 = scmp.ne.s32.totalorder %s114, %s128
      %p130 = scmp.eq.s32.totalorder %s20, 0
      %p131 = por %p129, %p130
      %s132 = ssub.s32 %s14, %s21
      %p133 = scmp.eq.s32.totalorder %s132, 0
      %s135 = sadd.s32 %s134, 1
      %s136 = scalar_select %p133, %s134, %s135
      %p139 = pneg %p133
      %p140 = scmp.eq.s32.totalorder %s14, 1
      %p141 = por %p139, %p140
      %p142 = scmp.ne.s32.totalorder %s134, %s137
      %p143 = scmp.eq.s32.totalorder %s14, 0
      %p144 = por %p142, %p143
      %p145 = scmp.ne.s32.totalorder %s134, %s137
      %p146 = scmp.eq.s32.totalorder %s19, 1
      %p147 = por %p145, %p146
      %p148 = scmp.ne.s32.totalorder %s137, %s138
      %p149 = scmp.eq.s32.totalorder %s19, 0
      %p150 = por %p148, %p149
      %p151 = scmp.ne.s32.totalorder %s137, %s138
      %p152 = scmp.eq.s32.totalorder %s20, 1
      %p153 = por %p151, %p152
      %p155 = scmp.ne.s32.totalorder %s138, %s154
      %p156 = scmp.eq.s32.totalorder %s20, 0
      %p157 = por %p155, %p156
      %p158 = scmp.le.s32.totalorder 1, %s14
      %p159 = scmp.lt.s32.totalorder %s14, 3
      %p160 = pnand %p158, %p159
      %p161 = pneg %p160
      // Predicated region
      $region9: #{tpu_custom_call.1} parent=5 // pred_check
        _
      $region10: #{tpu_custom_call.1} parent=5 // pred_check_branch
        %163 = sbr.rel (%p160) target = $region12
      $region11: #{tpu_custom_call.1} parent=5 // pred_region
        %s164 = ssub.s32 %s14, 1
        // Predicated region
        $region13: #{tpu_custom_call.1} parent=11 // pred_check
          %p165 = pneg %p61
        $region14: #{tpu_custom_call.1} parent=11 // pred_check_branch
          %167 = sbr.rel (%p165) target = $region16
        $region15: #{tpu_custom_call.1} parent=11 // pred_region
          _
        $region16: #{tpu_custom_call.1} parent=11 // pred_fallthru
          _
        // Predicated region
        $region17: #{tpu_custom_call.1} parent=11 // pred_check
          %p168 = pneg %p82
        $region18: #{tpu_custom_call.1} parent=11 // pred_check_branch
          %170 = sbr.rel (%p168) target = $region20
        $region19: #{tpu_custom_call.1} parent=11 // pred_region
          _
        $region20: #{tpu_custom_call.1} parent=11 // pred_fallthru
          _
        // Predicated region
        $region21: #{tpu_custom_call.1} parent=11 // pred_check
          %p171 = pneg %p103
        $region22: #{tpu_custom_call.1} parent=11 // pred_check_branch
          %173 = sbr.rel (%p171) target = $region24
        $region23: #{tpu_custom_call.1} parent=11 // pred_region
          _
        $region24: #{tpu_custom_call.1} parent=11 // pred_fallthru
          _
        // Predicated region
        $region25: #{tpu_custom_call.1} parent=11 // pred_check
          %p174 = pneg %p124
        $region26: #{tpu_custom_call.1} parent=11 // pred_check_branch
          %176 = sbr.rel (%p174) target = $region28
        $region27: #{tpu_custom_call.1} parent=11 // pred_region
          _
        $region28: #{tpu_custom_call.1} parent=11 // pred_fallthru
          _
      $region12: #{tpu_custom_call.1} parent=5 // pred_fallthru
        _
      %p177 = scmp.lt.s32.totalorder %s14, 2
      // Predicated region
      $region29: #{tpu_custom_call.1} parent=5 // pred_check
        %p178 = pneg %p177
      $region30: #{tpu_custom_call.1} parent=5 // pred_check_branch
        %180 = sbr.rel (%p178) target = $region32
      $region31: #{tpu_custom_call.1} parent=5 // pred_region
        // Predicated region
        $region33: #{tpu_custom_call.1} parent=31 // pred_check
          %p181 = pneg %p34
        $region34: #{tpu_custom_call.1} parent=31 // pred_check_branch
          %183 = sbr.rel (%p181) target = $region36
        $region35: #{tpu_custom_call.1} parent=31 // pred_region
          %s184 = sand.u32 %s24, 1
          %s185 = scalar_lea.sflag [#allocation7], %s184
          %s186 = sand.u32 %s24, 1
          %s187 = smul.addr %s186, 128
          %s188 = scalar_lea.vmem [#allocation6], %s187
          %s190 = ssub.s32 2048, 2048
          %191 = vsyncadd %s185, %s190
          %s192 = smul.addr %s14, 16
          %s193 = smul.addr %s192, 128
          %s194 = scalar_lea.hbm %s0, %s193
          %s195 = sshll.u32 %s188, 4
          %s196 = int_to_ptr.vmem [resolvable:$true] %s195
          %201 = dma.hbm_to_vmem [thread:$0]  %s194, 2048, %s196, %s185, 128, 128, 8
        $region36: #{tpu_custom_call.1} parent=31 // pred_fallthru
          _
      $region32: #{tpu_custom_call.1} parent=5 // pred_fallthru
        _
      %p202 = scmp.le.s32.totalorder 1, %s14
      %p203 = scmp.lt.s32.totalorder %s14, 3
      %p204 = pnand %p202, %p203
      %p205 = pneg %p204
      // Predicated region
      $region37: #{tpu_custom_call.1} parent=5 // pred_check
        _
      $region38: #{tpu_custom_call.1} parent=5 // pred_check_branch
        %207 = sbr.rel (%p204) target = $region40
      $region39: #{tpu_custom_call.1} parent=5 // pred_region
        %s208 = ssub.s32 %s14, 1
        %s209 = sand.u32 %s27, 1
        %s210 = scalar_lea.sflag [#allocation7], %s209
        %s211 = sand.u32 %s27, 1
        %s212 = smul.addr %s211, 128
        %s213 = scalar_lea.vmem [#allocation6], %s212
        // Predicated region
        $region41: #{tpu_custom_call.1} parent=39 // pred_check
          %p214 = pneg %p40
        $region42: #{tpu_custom_call.1} parent=39 // pred_check_branch
          %216 = sbr.rel (%p214) target = $region44
        $region43: #{tpu_custom_call.1} parent=39 // pred_region
          %217 = dma.done %s210, 2048
        $region44: #{tpu_custom_call.1} parent=39 // pred_fallthru
          _
        %s218 = sand.u32 %s27, 1
        %s219 = scalar_lea.sflag [#allocation7], %s218
        %s220 = sand.u32 %s27, 1
        %s221 = smul.addr %s220, 128
        %s222 = scalar_lea.vmem [#allocation6], %s221
        %p223 = pneg %p40
        %p224 = pneg %p37
        %p225 = pneg %p61
        %p226 = pneg %p58
        %p227 = pneg %p82
        %p228 = pneg %p79
        %p229 = pneg %p103
        %p230 = pneg %p100
        %p231 = pneg %p124
        %p232 = pneg %p121
        %p233 = pneg %p150
        %p234 = pneg %p147
        %p235 = scmp.lt.s32.totalorder %s19, 1
        %s236 = scalar_select %p235, %s19, 1
        %s237 = smul.addr %s236, 8
        %s238 = smul.addr %s237, 8
        %s239 = scalar_lea.vmem %s5, %s238
        %p240 = scmp.lt.s32.totalorder %s19, 1
        %s241 = scalar_select %p240, %s19, 1
        %s242 = smul.addr %s241, 8
        %s243 = smul.addr %s242, 8
        %s244 = scalar_lea.vmem %s5, %s243
        %v246 = vld [vmem:[%s213] sm:$0xff]
        %v247 = vld [vmem:[%s213 + $0x10] sm:$0xff]
        %v248 = vld [vmem:[%s213 + $0x20] sm:$0xff]
        %v249 = vld [vmem:[%s213 + $0x30] sm:$0xff]
        %v250 = vld [vmem:[%s213 + $0x40] sm:$0xff]
        %v251 = vld [vmem:[%s213 + $0x50] sm:$0xff]
        %v252 = vld [vmem:[%s213 + $0x60] sm:$0xff]
        %v253 = vld [vmem:[%s213 + $0x70] sm:$0xff]
        %s254 = scalar_lea.vmem %s213, 8 [#allocation6]
        %v255 = vld [vmem:[%s254] sm:$0xff]
        %v256 = vld [vmem:[%s254 + $0x10] sm:$0xff]
        %v257 = vld [vmem:[%s254 + $0x20] sm:$0xff]
        %v258 = vld [vmem:[%s254 + $0x30] sm:$0xff]
        %v259 = vld [vmem:[%s254 + $0x40] sm:$0xff]
        %v260 = vld [vmem:[%s254 + $0x50] sm:$0xff]
        %v261 = vld [vmem:[%s254 + $0x60] sm:$0xff]
        %v262 = vld [vmem:[%s254 + $0x70] sm:$0xff]
        %271 = vrot.lane.b32.xlu0 %v246, 124
        %v272 = vpop.permute.xlu0 %271
        %273 = vrot.lane.b32.xlu0 %v247, 124
        %v274 = vpop.permute.xlu0 %273
        %275 = vrot.lane.b32.xlu0 %v248, 124
        %v276 = vpop.permute.xlu0 %275
        %277 = vrot.lane.b32.xlu0 %v249, 124
        %v278 = vpop.permute.xlu0 %277
        %279 = vrot.lane.b32.xlu0 %v250, 124
        %v280 = vpop.permute.xlu0 %279
        %281 = vrot.lane.b32.xlu0 %v251, 124
        %v282 = vpop.permute.xlu0 %281
        %283 = vrot.lane.b32.xlu0 %v252, 124
        %v284 = vpop.permute.xlu0 %283
        %285 = vrot.lane.b32.xlu0 %v253, 124
        %v286 = vpop.permute.xlu0 %285
        %v295 = vmax.f32 %v246, %v272
        %v296 = vmax.f32 %v247, %v274
        %v297 = vmax.f32 %v248, %v276
        %v298 = vmax.f32 %v249, %v278
        %v299 = vmax.f32 %v250, %v280
        %v300 = vmax.f32 %v251, %v282
        %v301 = vmax.f32 %v252, %v284
        %v302 = vmax.f32 %v253, %v286
        %311 = vrot.lane.b32.xlu0 %v255, 124
        %v312 = vpop.permute.xlu0 %311
        %313 = vrot.lane.b32.xlu0 %v256, 124
        %v314 = vpop.permute.xlu0 %313
        %315 = vrot.lane.b32.xlu0 %v257, 124
        %v316 = vpop.permute.xlu0 %315
        %317 = vrot.lane.b32.xlu0 %v258, 124
        %v318 = vpop.permute.xlu0 %317
        %319 = vrot.lane.b32.xlu0 %v259, 124
        %v320 = vpop.permute.xlu0 %319
        %321 = vrot.lane.b32.xlu0 %v260, 124
        %v322 = vpop.permute.xlu0 %321
        %323 = vrot.lane.b32.xlu0 %v261, 124
        %v324 = vpop.permute.xlu0 %323
        %325 = vrot.lane.b32.xlu0 %v262, 124
        %v326 = vpop.permute.xlu0 %325
        %v335 = vmax.f32 %v255, %v312
        %v336 = vmax.f32 %v256, %v314
        %v337 = vmax.f32 %v257, %v316
        %v338 = vmax.f32 %v258, %v318
        %v339 = vmax.f32 %v259, %v320
        %v340 = vmax.f32 %v260, %v322
        %v341 = vmax.f32 %v261, %v324
        %v342 = vmax.f32 %v262, %v326
        %v343 = vmax.f32 %v295, %v335
        %v344 = vmax.f32 %v296, %v336
        %v345 = vmax.f32 %v297, %v337
        %v346 = vmax.f32 %v298, %v338
        %v347 = vmax.f32 %v299, %v339
        %v348 = vmax.f32 %v300, %v340
        %v349 = vmax.f32 %v301, %v341
        %v350 = vmax.f32 %v302, %v342
        %vm351 = vcmask 31744
        %352 = vst.msk [vmem:[#allocation2] sm:$0xff] %vm351, 0.0
        %vm353 = vcmask 25600
        %354 = vst.msk [vmem:[#allocation2 + $0x8] sm:$0x3] %vm353, 0.0
        %s355 = scalar_lea.vmem [#allocation2], 144
        %356 = vst.msk [vmem:[%s355] sm:$0xff] %vm351, 0.0
        %357 = vst.msk [vmem:[%s355 + $0x8] sm:$0x3] %vm353, 0.0
        %vm358 = vcmask 24576
        %359 = vst.msk [vmem:[#allocation2] sm:$0x1] %vm358, 0.0
        %360 = vst.msk [vmem:[#allocation2 + $0x10] sm:$0x1] %vm358, 0.0
        %361 = vst.msk [vmem:[#allocation2 + $0x20] sm:$0x1] %vm358, 0.0
        %362 = vst.msk [vmem:[#allocation2 + $0x30] sm:$0x1] %vm358, 0.0
        %363 = vst.msk [vmem:[#allocation2 + $0x40] sm:$0x1] %vm358, 0.0
        %364 = vst.msk [vmem:[#allocation2 + $0x50] sm:$0x1] %vm358, 0.0
        %365 = vst.msk [vmem:[#allocation2 + $0x60] sm:$0x1] %vm358, 0.0
        %366 = vst.msk [vmem:[#allocation2 + $0x70] sm:$0x1] %vm358, 0.0
        %367 = vst.msk [vmem:[#allocation2 + $0x80] sm:$0x1] %vm358, 0.0
        %368 = vst.msk [vmem:[#allocation2 + $0x90] sm:$0x1] %vm358, 0.0
        %369 = vst.msk [vmem:[#allocation2 + $0x9] sm:$0x1] %vm358, 0.0
        %370 = vst.msk [vmem:[#allocation2 + $0x19] sm:$0x1] %vm358, 0.0
        %371 = vst.msk [vmem:[#allocation2 + $0x29] sm:$0x1] %vm358, 0.0
        %372 = vst.msk [vmem:[#allocation2 + $0x39] sm:$0x1] %vm358, 0.0
        %373 = vst.msk [vmem:[#allocation2 + $0x49] sm:$0x1] %vm358, 0.0
        %374 = vst.msk [vmem:[#allocation2 + $0x59] sm:$0x1] %vm358, 0.0
        %375 = vst.msk [vmem:[#allocation2 + $0x69] sm:$0x1] %vm358, 0.0
        %376 = vst.msk [vmem:[#allocation2 + $0x79] sm:$0x1] %vm358, 0.0
        %377 = vst.msk [vmem:[#allocation2 + $0x89] sm:$0x1] %vm358, 0.0
        %378 = vst.msk [vmem:[#allocation2 + $0x99] sm:$0x1] %vm358, 0.0
        %vm379 = vcmask 64512
        %380 = vst.msk [vmem:[#allocation4] sm:$0xff] %vm379, 0.0
        %vm381 = vcmask 58368
        %382 = vst.msk [vmem:[#allocation4 + $0x8] sm:$0x3] %vm381, 0.0
        %s383 = scalar_lea.vmem [#allocation4], 144
        %384 = vst.msk [vmem:[%s383] sm:$0xff] %vm379, 0.0
        %385 = vst.msk [vmem:[%s383 + $0x8] sm:$0x3] %vm381, 0.0
        %vm386 = vcmask 57344
        %387 = vst.msk [vmem:[#allocation4] sm:$0x1] %vm386, 0.0
        %388 = vst.msk [vmem:[#allocation4 + $0x10] sm:$0x1] %vm386, 0.0
        %389 = vst.msk [vmem:[#allocation4 + $0x20] sm:$0x1] %vm386, 0.0
        %390 = vst.msk [vmem:[#allocation4 + $0x30] sm:$0x1] %vm386, 0.0
        %391 = vst.msk [vmem:[#allocation4 + $0x40] sm:$0x1] %vm386, 0.0
        %392 = vst.msk [vmem:[#allocation4 + $0x50] sm:$0x1] %vm386, 0.0
        %393 = vst.msk [vmem:[#allocation4 + $0x60] sm:$0x1] %vm386, 0.0
        %394 = vst.msk [vmem:[#allocation4 + $0x70] sm:$0x1] %vm386, 0.0
        %395 = vst.msk [vmem:[#allocation4 + $0x80] sm:$0x1] %vm386, 0.0
        %396 = vst.msk [vmem:[#allocation4 + $0x90] sm:$0x1] %vm386, 0.0
        %397 = vst.msk [vmem:[#allocation4 + $0x9] sm:$0x1] %vm386, 0.0
        %398 = vst.msk [vmem:[#allocation4 + $0x19] sm:$0x1] %vm386, 0.0
        %399 = vst.msk [vmem:[#allocation4 + $0x29] sm:$0x1] %vm386, 0.0
        %400 = vst.msk [vmem:[#allocation4 + $0x39] sm:$0x1] %vm386, 0.0
        %401 = vst.msk [vmem:[#allocation4 + $0x49] sm:$0x1] %vm386, 0.0
        %402 = vst.msk [vmem:[#allocation4 + $0x59] sm:$0x1] %vm386, 0.0
        %403 = vst.msk [vmem:[#allocation4 + $0x69] sm:$0x1] %vm386, 0.0
        %404 = vst.msk [vmem:[#allocation4 + $0x79] sm:$0x1] %vm386, 0.0
        %405 = vst.msk [vmem:[#allocation4 + $0x89] sm:$0x1] %vm386, 0.0
        %406 = vst.msk [vmem:[#allocation4 + $0x99] sm:$0x1] %vm386, 0.0
        %s407 = scalar_lea.vmem [#allocation2], 16
        %408 = vst.msk [vmem:[%s407 + $0x1] sm:$0xff] %vm351, %v343
        %409 = vst.msk [vmem:[%s407 + $0x11] sm:$0xff] %vm351, %v344
        %410 = vst.msk [vmem:[%s407 + $0x21] sm:$0xff] %vm351, %v345
        %411 = vst.msk [vmem:[%s407 + $0x31] sm:$0xff] %vm351, %v346
        %412 = vst.msk [vmem:[%s407 + $0x41] sm:$0xff] %vm351, %v347
        %413 = vst.msk [vmem:[%s407 + $0x51] sm:$0xff] %vm351, %v348
        %414 = vst.msk [vmem:[%s407 + $0x61] sm:$0xff] %vm351, %v349
        %415 = vst.msk [vmem:[%s407 + $0x71] sm:$0xff] %vm351, %v350
        %v416 = vld [vmem:[#allocation2] sm:$0xff]
        %v417 = vld [vmem:[#allocation2 + $0x10] sm:$0xff]
        %v418 = vld [vmem:[#allocation2 + $0x20] sm:$0xff]
        %v419 = vld [vmem:[#allocation2 + $0x30] sm:$0xff]
        %v420 = vld [vmem:[#allocation2 + $0x40] sm:$0xff]
        %v421 = vld [vmem:[#allocation2 + $0x50] sm:$0xff]
        %v422 = vld [vmem:[#allocation2 + $0x60] sm:$0xff]
        %v423 = vld [vmem:[#allocation2 + $0x70] sm:$0xff]
        %v424 = vpack.c.bf16 %v417, %v416
        %v425 = vpack.c.bf16 %v419, %v418
        %v426 = vpack.c.bf16 %v421, %v420
        %v427 = vpack.c.bf16 %v423, %v422
        %428 = vst.msk [vmem:[#allocation3] sm:$0xff] %vm351, %v424
        %429 = vst.msk [vmem:[#allocation3 + $0x8] sm:$0xff] %vm351, %v425
        %430 = vst.msk [vmem:[#allocation3 + $0x10] sm:$0xff] %vm351, %v426
        %431 = vst.msk [vmem:[#allocation3 + $0x18] sm:$0xff] %vm351, %v427
        %v432 = vld [vmem:[#allocation2 + $0x1] sm:$0xff]
        %v433 = vld [vmem:[#allocation2 + $0x11] sm:$0xff]
        %v434 = vld [vmem:[#allocation2 + $0x21] sm:$0xff]
        %v435 = vld [vmem:[#allocation2 + $0x31] sm:$0xff]
        %v436 = vld [vmem:[#allocation2 + $0x41] sm:$0xff]
        %v437 = vld [vmem:[#allocation2 + $0x51] sm:$0xff]
        %v438 = vld [vmem:[#allocation2 + $0x61] sm:$0xff]
        %v439 = vld [vmem:[#allocation2 + $0x71] sm:$0xff]
        %v440 = vpack.c.bf16 %v433, %v432
        %v441 = vpack.c.bf16 %v435, %v434
        %v442 = vpack.c.bf16 %v437, %v436
        %v443 = vpack.c.bf16 %v439, %v438
        %448 = vrot.lane.b32.xlu0 %v440, 4
        %v449 = vpop.permute.xlu0 %448
        %450 = vrot.lane.b32.xlu0 %v441, 4
        %v451 = vpop.permute.xlu0 %450
        %452 = vrot.lane.b32.xlu0 %v442, 4
        %v453 = vpop.permute.xlu0 %452
        %454 = vrot.lane.b32.xlu0 %v443, 4
        %v455 = vpop.permute.xlu0 %454
        %vm460 = vcmask 64544
        %461 = vst.msk [vmem:[#allocation3] sm:$0xff] %vm460, %v449
        %462 = vst.msk [vmem:[#allocation3 + $0x8] sm:$0xff] %vm460, %v451
        %463 = vst.msk [vmem:[#allocation3 + $0x10] sm:$0xff] %vm460, %v453
        %464 = vst.msk [vmem:[#allocation3 + $0x18] sm:$0xff] %vm460, %v455
        %v465 = vld [vmem:[#allocation2 + $0x2] sm:$0xff]
        %v466 = vld [vmem:[#allocation2 + $0x12] sm:$0xff]
        %v467 = vld [vmem:[#allocation2 + $0x22] sm:$0xff]
        %v468 = vld [vmem:[#allocation2 + $0x32] sm:$0xff]
        %v469 = vld [vmem:[#allocation2 + $0x42] sm:$0xff]
        %v470 = vld [vmem:[#allocation2 + $0x52] sm:$0xff]
        %v471 = vld [vmem:[#allocation2 + $0x62] sm:$0xff]
        %v472 = vld [vmem:[#allocation2 + $0x72] sm:$0xff]
        %v473 = vpack.c.bf16 %v466, %v465
        %v474 = vpack.c.bf16 %v468, %v467
        %v475 = vpack.c.bf16 %v470, %v469
        %v476 = vpack.c.bf16 %v472, %v471
        %481 = vrot.lane.b32.xlu0 %v473, 8
        %v482 = vpop.permute.xlu0 %481
        %483 = vrot.lane.b32.xlu0 %v474, 8
        %v484 = vpop.permute.xlu0 %483
        %485 = vrot.lane.b32.xlu0 %v475, 8
        %v486 = vpop.permute.xlu0 %485
        %487 = vrot.lane.b32.xlu0 %v476, 8
        %v488 = vpop.permute.xlu0 %487
        %vm493 = vcmask 97344
        %494 = vst.msk [vmem:[#allocation3] sm:$0xff] %vm493, %v482
        %495 = vst.msk [vmem:[#allocation3 + $0x8] sm:$0xff] %vm493, %v484
        %496 = vst.msk [vmem:[#allocation3 + $0x10] sm:$0xff] %vm493, %v486
        %497 = vst.msk [vmem:[#allocation3 + $0x18] sm:$0xff] %vm493, %v488
        %v498 = vld [vmem:[%s407] sm:$0xff]
        %v499 = vld [vmem:[%s407 + $0x10] sm:$0xff]
        %v500 = vld [vmem:[%s407 + $0x20] sm:$0xff]
        %v501 = vld [vmem:[%s407 + $0x30] sm:$0xff]
        %v502 = vld [vmem:[%s407 + $0x40] sm:$0xff]
        %v503 = vld [vmem:[%s407 + $0x50] sm:$0xff]
        %v504 = vld [vmem:[%s407 + $0x60] sm:$0xff]
        %v505 = vld [vmem:[%s407 + $0x70] sm:$0xff]
        %v506 = vpack.c.bf16 %v499, %v498
        %v507 = vpack.c.bf16 %v501, %v500
        %v508 = vpack.c.bf16 %v503, %v502
        %v509 = vpack.c.bf16 %v505, %v504
        %514 = vrot.lane.b32.xlu0 %v506, 12
        %v515 = vpop.permute.xlu0 %514
        %516 = vrot.lane.b32.xlu0 %v507, 12
        %v517 = vpop.permute.xlu0 %516
        %518 = vrot.lane.b32.xlu0 %v508, 12
        %v519 = vpop.permute.xlu0 %518
        %520 = vrot.lane.b32.xlu0 %v509, 12
        %v521 = vpop.permute.xlu0 %520
        %vm526 = vcmask 130144
        %527 = vst.msk [vmem:[#allocation3] sm:$0xff] %vm526, %v515
        %528 = vst.msk [vmem:[#allocation3 + $0x8] sm:$0xff] %vm526, %v517
        %529 = vst.msk [vmem:[#allocation3 + $0x10] sm:$0xff] %vm526, %v519
        %530 = vst.msk [vmem:[#allocation3 + $0x18] sm:$0xff] %vm526, %v521
        %v531 = vld [vmem:[%s407 + $0x1] sm:$0xff]
        %v532 = vld [vmem:[%s407 + $0x11] sm:$0xff]
        %v533 = vld [vmem:[%s407 + $0x21] sm:$0xff]
        %v534 = vld [vmem:[%s407 + $0x31] sm:$0xff]
        %v535 = vld [vmem:[%s407 + $0x41] sm:$0xff]
        %v536 = vld [vmem:[%s407 + $0x51] sm:$0xff]
        %v537 = vld [vmem:[%s407 + $0x61] sm:$0xff]
        %v538 = vld [vmem:[%s407 + $0x71] sm:$0xff]
        %v539 = vpack.c.bf16 %v532, %v531
        %v540 = vpack.c.bf16 %v534, %v533
        %v541 = vpack.c.bf16 %v536, %v535
        %v542 = vpack.c.bf16 %v538, %v537
        %547 = vrot.lane.b32.xlu0 %v539, 16
        %v548 = vpop.permute.xlu0 %547
        %549 = vrot.lane.b32.xlu0 %v540, 16
        %v550 = vpop.permute.xlu0 %549
        %551 = vrot.lane.b32.xlu0 %v541, 16
        %v552 = vpop.permute.xlu0 %551
        %553 = vrot.lane.b32.xlu0 %v542, 16
        %v554 = vpop.permute.xlu0 %553
        %vm559 = vcmask 162944
        %560 = vst.msk [vmem:[#allocation3] sm:$0xff] %vm559, %v548
        %561 = vst.msk [vmem:[#allocation3 + $0x8] sm:$0xff] %vm559, %v550
        %562 = vst.msk [vmem:[#allocation3 + $0x10] sm:$0xff] %vm559, %v552
        %563 = vst.msk [vmem:[#allocation3 + $0x18] sm:$0xff] %vm559, %v554
        %v564 = vld [vmem:[%s407 + $0x2] sm:$0xff]
        %v565 = vld [vmem:[%s407 + $0x12] sm:$0xff]
        %v566 = vld [vmem:[%s407 + $0x22] sm:$0xff]
        %v567 = vld [vmem:[%s407 + $0x32] sm:$0xff]
        %v568 = vld [vmem:[%s407 + $0x42] sm:$0xff]
        %v569 = vld [vmem:[%s407 + $0x52] sm:$0xff]
        %v570 = vld [vmem:[%s407 + $0x62] sm:$0xff]
        %v571 = vld [vmem:[%s407 + $0x72] sm:$0xff]
        %v572 = vpack.c.bf16 %v565, %v564
        %v573 = vpack.c.bf16 %v567, %v566
        %v574 = vpack.c.bf16 %v569, %v568
        %v575 = vpack.c.bf16 %v571, %v570
        %580 = vrot.lane.b32.xlu0 %v572, 20
        %v581 = vpop.permute.xlu0 %580
        %582 = vrot.lane.b32.xlu0 %v573, 20
        %v583 = vpop.permute.xlu0 %582
        %584 = vrot.lane.b32.xlu0 %v574, 20
        %v585 = vpop.permute.xlu0 %584
        %586 = vrot.lane.b32.xlu0 %v575, 20
        %v587 = vpop.permute.xlu0 %586
        %vm592 = vcmask 195744
        %593 = vst.msk [vmem:[#allocation3] sm:$0xff] %vm592, %v581
        %594 = vst.msk [vmem:[#allocation3 + $0x8] sm:$0xff] %vm592, %v583
        %595 = vst.msk [vmem:[#allocation3 + $0x10] sm:$0xff] %vm592, %v585
        %596 = vst.msk [vmem:[#allocation3 + $0x18] sm:$0xff] %vm592, %v587
        %s597 = scalar_lea.vmem [#allocation2], 32
        %v598 = vld [vmem:[%s597] sm:$0xff]
        %v599 = vld [vmem:[%s597 + $0x10] sm:$0xff]
        %v600 = vld [vmem:[%s597 + $0x20] sm:$0xff]
        %v601 = vld [vmem:[%s597 + $0x30] sm:$0xff]
        %v602 = vld [vmem:[%s597 + $0x40] sm:$0xff]
        %v603 = vld [vmem:[%s597 + $0x50] sm:$0xff]
        %v604 = vld [vmem:[%s597 + $0x60] sm:$0xff]
        %v605 = vld [vmem:[%s597 + $0x70] sm:$0xff]
        %v606 = vpack.c.bf16 %v599, %v598
        %v607 = vpack.c.bf16 %v601, %v600
        %v608 = vpack.c.bf16 %v603, %v602
        %v609 = vpack.c.bf16 %v605, %v604
        %614 = vrot.lane.b32.xlu0 %v606, 24
        %v615 = vpop.permute.xlu0 %614
        %616 = vrot.lane.b32.xlu0 %v607, 24
        %v617 = vpop.permute.xlu0 %616
        %618 = vrot.lane.b32.xlu0 %v608, 24
        %v619 = vpop.permute.xlu0 %618
        %620 = vrot.lane.b32.xlu0 %v609, 24
        %v621 = vpop.permute.xlu0 %620
        %vm626 = vcmask 228544
        %627 = vst.msk [vmem:[#allocation3] sm:$0xff] %vm626, %v615
        %628 = vst.msk [vmem:[#allocation3 + $0x8] sm:$0xff] %vm626, %v617
        %629 = vst.msk [vmem:[#allocation3 + $0x10] sm:$0xff] %vm626, %v619
        %630 = vst.msk [vmem:[#allocation3 + $0x18] sm:$0xff] %vm626, %v621
        %v631 = vld [vmem:[%s597 + $0x1] sm:$0xff]
        %v632 = vld [vmem:[%s597 + $0x11] sm:$0xff]
        %v633 = vld [vmem:[%s597 + $0x21] sm:$0xff]
        %v634 = vld [vmem:[%s597 + $0x31] sm:$0xff]
        %v635 = vld [vmem:[%s597 + $0x41] sm:$0xff]
        %v636 = vld [vmem:[%s597 + $0x51] sm:$0xff]
        %v637 = vld [vmem:[%s597 + $0x61] sm:$0xff]
        %v638 = vld [vmem:[%s597 + $0x71] sm:$0xff]
        %v639 = vpack.c.bf16 %v632, %v631
        %v640 = vpack.c.bf16 %v634, %v633
        %v641 = vpack.c.bf16 %v636, %v635
        %v642 = vpack.c.bf16 %v638, %v637
        %647 = vrot.lane.b32.xlu0 %v639, 28
        %v648 = vpop.permute.xlu0 %647
        %649 = vrot.lane.b32.xlu0 %v640, 28
        %v650 = vpop.permute.xlu0 %649
        %651 = vrot.lane.b32.xlu0 %v641, 28
        %v652 = vpop.permute.xlu0 %651
        %653 = vrot.lane.b32.xlu0 %v642, 28
        %v654 = vpop.permute.xlu0 %653
        %vm659 = vcmask 261344
        %660 = vst.msk [vmem:[#allocation3] sm:$0xff] %vm659, %v648
        %661 = vst.msk [vmem:[#allocation3 + $0x8] sm:$0xff] %vm659, %v650
        %662 = vst.msk [vmem:[#allocation3 + $0x10] sm:$0xff] %vm659, %v652
        %663 = vst.msk [vmem:[#allocation3 + $0x18] sm:$0xff] %vm659, %v654
        %v664 = vld [vmem:[%s597 + $0x2] sm:$0xff]
        %v665 = vld [vmem:[%s597 + $0x12] sm:$0xff]
        %v666 = vld [vmem:[%s597 + $0x22] sm:$0xff]
        %v667 = vld [vmem:[%s597 + $0x32] sm:$0xff]
        %v668 = vld [vmem:[%s597 + $0x42] sm:$0xff]
        %v669 = vld [vmem:[%s597 + $0x52] sm:$0xff]
        %v670 = vld [vmem:[%s597 + $0x62] sm:$0xff]
        %v671 = vld [vmem:[%s597 + $0x72] sm:$0xff]
        %v672 = vpack.c.bf16 %v665, %v664
        %v673 = vpack.c.bf16 %v667, %v666
        %v674 = vpack.c.bf16 %v669, %v668
        %v675 = vpack.c.bf16 %v671, %v670
        %680 = vrot.lane.b32.xlu0 %v672, 32
        %v681 = vpop.permute.xlu0 %680
        %682 = vrot.lane.b32.xlu0 %v673, 32
        %v683 = vpop.permute.xlu0 %682
        %684 = vrot.lane.b32.xlu0 %v674, 32
        %v685 = vpop.permute.xlu0 %684
        %686 = vrot.lane.b32.xlu0 %v675, 32
        %v687 = vpop.permute.xlu0 %686
        %vm692 = vcmask 294144
        %693 = vst.msk [vmem:[#allocation3] sm:$0xff] %vm692, %v681
        %694 = vst.msk [vmem:[#allocation3 + $0x8] sm:$0xff] %vm692, %v683
        %695 = vst.msk [vmem:[#allocation3 + $0x10] sm:$0xff] %vm692, %v685
        %696 = vst.msk [vmem:[#allocation3 + $0x18] sm:$0xff] %vm692, %v687
        %v697 = vld [vmem:[#allocation3] sm:$0xff]
        %v698 = vld [vmem:[#allocation3 + $0x8] sm:$0xff]
        %v699 = vld [vmem:[#allocation3 + $0x10] sm:$0xff]
        %v700 = vld [vmem:[#allocation3 + $0x18] sm:$0xff]
        %v701 = vld [vmem:[%s1] sm:$0xf]
        %v702 = vld [vmem:[%s1 + $0x4] sm:$0xf]
        %v703 = vld [vmem:[%s1 + $0x8] sm:$0xf]
        %v704 = vld [vmem:[%s1 + $0xc] sm:$0xf]
        %v705 = vld [vmem:[%s1 + $0x10] sm:$0x3]
        %v706 = vld [vmem:[%s2] sm:$0x1]
        %v708 = vlaneseq
        %v709 = vshrl.u32 %v708, 7
        %v710 = vsub.s32 0, %v709
        %v711 = vrot.slane %v706, %v710
        %v718 = vunpack.c.l.b16 %v701
        %v719 = vunpack.c.l.b16 %v702
        %v720 = vunpack.c.l.b16 %v703
        %v721 = vunpack.c.l.b16 %v704
        %v722 = vunpack.c.l.b16 %v705
        %v723 = vpack.c.b16 %v719, %v718
        %v724 = vpack.c.b16 %v721, %v720
        %v725 = vpack.c.b16 %v722, %v722
        %vm728 = vcmask 293888
        %v730 = vsel %vm728, %v697, 0
        %v733 = vsel %vm728, %v698, 0
        %v736 = vsel %vm728, %v699, 0
        %v739 = vsel %vm728, %v700, 0
        %vm741 = vcmask 1041408
        %v743 = vsel %vm741, %v725, 0
        %745 = vmatprep.subr.bf16.mxu0 0
        %746 = vmatpush1.bf16.msra.mxu0 %v723
        %747 = vmatprep.subr.bf16.mxu0 0
        %748 = vmatpush1.bf16.msra.mxu0 %v724
        %749 = vmatprep.subr.bf16.mxu0 0
        %750 = vmatpush1.bf16.msra.mxu0 %v743
        %751 = vmatprep.subr.bf16.mxu0 0
        %752 = vmatpush1.bf16.msra.mxu0 0
        %753 = vmatprep.subr.bf16.mxu0 0
        %754 = vmatpush1.bf16.msra.mxu0 0
        %755 = vmatprep.subr.bf16.mxu0 0
        %756 = vmatpush1.bf16.msra.mxu0 0
        %757 = vmatprep.subr.bf16.mxu0 0
        %758 = vmatpush1.bf16.msra.mxu0 0
        %759 = vmatprep.subr.bf16.mxu0 0
        %760 = vmatpush1.bf16.msra.mxu0 0
        %761 = vmatprep.subr.bf16.mxu0 0
        %762 = vmatpush1.bf16.msra.mxu0 0
        %763 = vmatprep.subr.bf16.mxu0 0
        %764 = vmatpush1.bf16.msra.mxu0 0
        %765 = vmatprep.subr.bf16.mxu0 0
        %766 = vmatpush1.bf16.msra.mxu0 0
        %767 = vmatprep.subr.bf16.mxu0 0
        %768 = vmatpush1.bf16.msra.mxu0 0
        %769 = vmatprep.subr.bf16.mxu0 0
        %770 = vmatpush1.bf16.msra.mxu0 0
        %771 = vmatprep.subr.bf16.mxu0 0
        %772 = vmatpush1.bf16.msra.mxu0 0
        %773 = vmatprep.subr.bf16.mxu0 0
        %774 = vmatpush1.bf16.msra.mxu0 0
        %775 = vmatprep.subr.bf16.mxu0 0
        %776 = vmatpush1.bf16.msra.mxu0 0
        %777 = vmatprep.mubr.bf16.mxu0 0
        %778 = vmatmul.mubr.bf16.gmra.mrb[0].mxu0 %v730
        %v779 = vpop.f32.mrb[0].mxu0
        %v780 = vadd.f32 %v711, %v779
        %v781 = vpop.f32.mrb[0].mxu0
        %v782 = vpop.f32.mrb[0].mxu0
        %v783 = vadd.f32 %v711, %v782
        %v784 = vpop.f32.mrb[0].mxu0
        %785 = vmatprep.mubr.bf16.mxu0 0
        %786 = vmatmul.mubr.bf16.gmra.mrb[0].mxu0 %v733
        %v787 = vpop.f32.mrb[0].mxu0
        %v788 = vadd.f32 %v711, %v787
        %v789 = vpop.f32.mrb[0].mxu0
        %v790 = vpop.f32.mrb[0].mxu0
        %v791 = vadd.f32 %v711, %v790
        %v792 = vpop.f32.mrb[0].mxu0
        %793 = vmatprep.mubr.bf16.mxu0 0
        %794 = vmatmul.mubr.bf16.gmra.mrb[0].mxu0 %v736
        %v795 = vpop.f32.mrb[0].mxu0
        %v796 = vadd.f32 %v711, %v795
        %v797 = vpop.f32.mrb[0].mxu0
        %v798 = vpop.f32.mrb[0].mxu0
        %v799 = vadd.f32 %v711, %v798
        %v800 = vpop.f32.mrb[0].mxu0
        %801 = vmatprep.mubr.bf16.mxu0 0
        %802 = vmatmul.mubr.bf16.gmra.mrb[0].mxu0 %v739
        %v803 = vpop.f32.mrb[0].mxu0
        %v804 = vadd.f32 %v711, %v803
        %v805 = vpop.f32.mrb[0].mxu0
        %v806 = vpop.f32.mrb[0].mxu0
        %v807 = vadd.f32 %v711, %v806
        %v808 = vpop.f32.mrb[0].mxu0
        %809 = vdwg.mxu0
        %v810 = vmax.f32 %v780, 0.0
        %v811 = vmax.f32 %v783, 0.0
        %v812 = vmax.f32 %v788, 0.0
        %v813 = vmax.f32 %v791, 0.0
        %v814 = vmax.f32 %v796, 0.0
        %v815 = vmax.f32 %v799, 0.0
        %v816 = vmax.f32 %v804, 0.0
        %v817 = vmax.f32 %v807, 0.0
        %s818 = scalar_lea.vmem [#allocation4], 16
        %819 = vst.msk [vmem:[%s818 + $0x1] sm:$0xff] %vm379, %v810
        %820 = vst.msk [vmem:[%s818 + $0x11] sm:$0xff] %vm379, %v811
        %821 = vst.msk [vmem:[%s818 + $0x21] sm:$0xff] %vm379, %v812
        %822 = vst.msk [vmem:[%s818 + $0x31] sm:$0xff] %vm379, %v813
        %823 = vst.msk [vmem:[%s818 + $0x41] sm:$0xff] %vm379, %v814
        %824 = vst.msk [vmem:[%s818 + $0x51] sm:$0xff] %vm379, %v815
        %825 = vst.msk [vmem:[%s818 + $0x61] sm:$0xff] %vm379, %v816
        %826 = vst.msk [vmem:[%s818 + $0x71] sm:$0xff] %vm379, %v817
        %v827 = vld [vmem:[#allocation4] sm:$0xff]
        %v828 = vld [vmem:[#allocation4 + $0x10] sm:$0xff]
        %v829 = vld [vmem:[#allocation4 + $0x20] sm:$0xff]
        %v830 = vld [vmem:[#allocation4 + $0x30] sm:$0xff]
        %v831 = vld [vmem:[#allocation4 + $0x40] sm:$0xff]
        %v832 = vld [vmem:[#allocation4 + $0x50] sm:$0xff]
        %v833 = vld [vmem:[#allocation4 + $0x60] sm:$0xff]
        %v834 = vld [vmem:[#allocation4 + $0x70] sm:$0xff]
        %v835 = vpack.c.bf16 %v828, %v827
        %v836 = vpack.c.bf16 %v830, %v829
        %v837 = vpack.c.bf16 %v832, %v831
        %v838 = vpack.c.bf16 %v834, %v833
        %839 = vst.msk [vmem:[#allocation5] sm:$0xff] %vm379, %v835
        %840 = vst.msk [vmem:[#allocation5 + $0x8] sm:$0xff] %vm379, %v836
        %841 = vst.msk [vmem:[#allocation5 + $0x10] sm:$0xff] %vm379, %v837
        %842 = vst.msk [vmem:[#allocation5 + $0x18] sm:$0xff] %vm379, %v838
        %v843 = vld [vmem:[#allocation4 + $0x1] sm:$0xff]
        %v844 = vld [vmem:[#allocation4 + $0x11] sm:$0xff]
        %v845 = vld [vmem:[#allocation4 + $0x21] sm:$0xff]
        %v846 = vld [vmem:[#allocation4 + $0x31] sm:$0xff]
        %v847 = vld [vmem:[#allocation4 + $0x41] sm:$0xff]
        %v848 = vld [vmem:[#allocation4 + $0x51] sm:$0xff]
        %v849 = vld [vmem:[#allocation4 + $0x61] sm:$0xff]
        %v850 = vld [vmem:[#allocation4 + $0x71] sm:$0xff]
        %v851 = vpack.c.bf16 %v844, %v843
        %v852 = vpack.c.bf16 %v846, %v845
        %v853 = vpack.c.bf16 %v848, %v847
        %v854 = vpack.c.bf16 %v850, %v849
        %859 = vrot.lane.b32.xlu0 %v851, 8
        %v860 = vpop.permute.xlu0 %859
        %861 = vrot.lane.b32.xlu0 %v852, 8
        %v862 = vpop.permute.xlu0 %861
        %863 = vrot.lane.b32.xlu0 %v853, 8
        %v864 = vpop.permute.xlu0 %863
        %865 = vrot.lane.b32.xlu0 %v854, 8
        %v866 = vpop.permute.xlu0 %865
        %vm871 = vcmask 130112
        %872 = vst.msk [vmem:[#allocation5] sm:$0xff] %vm871, %v860
        %873 = vst.msk [vmem:[#allocation5 + $0x8] sm:$0xff] %vm871, %v862
        %874 = vst.msk [vmem:[#allocation5 + $0x10] sm:$0xff] %vm871, %v864
        %875 = vst.msk [vmem:[#allocation5 + $0x18] sm:$0xff] %vm871, %v866
        %v876 = vld [vmem:[#allocation4 + $0x2] sm:$0xff]
        %v877 = vld [vmem:[#allocation4 + $0x12] sm:$0xff]
        %v878 = vld [vmem:[#allocation4 + $0x22] sm:$0xff]
        %v879 = vld [vmem:[#allocation4 + $0x32] sm:$0xff]
        %v880 = vld [vmem:[#allocation4 + $0x42] sm:$0xff]
        %v881 = vld [vmem:[#allocation4 + $0x52] sm:$0xff]
        %v882 = vld [vmem:[#allocation4 + $0x62] sm:$0xff]
        %v883 = vld [vmem:[#allocation4 + $0x72] sm:$0xff]
        %v884 = vpack.c.bf16 %v877, %v876
        %v885 = vpack.c.bf16 %v879, %v878
        %v886 = vpack.c.bf16 %v881, %v880
        %v887 = vpack.c.bf16 %v883, %v882
        %892 = vrot.lane.b32.xlu0 %v884, 16
        %v893 = vpop.permute.xlu0 %892
        %894 = vrot.lane.b32.xlu0 %v885, 16
        %v895 = vpop.permute.xlu0 %894
        %896 = vrot.lane.b32.xlu0 %v886, 16
        %v897 = vpop.permute.xlu0 %896
        %898 = vrot.lane.b32.xlu0 %v887, 16
        %v899 = vpop.permute.xlu0 %898
        %vm904 = vcmask 195712
        %905 = vst.msk [vmem:[#allocation5] sm:$0xff] %vm904, %v893
        %906 = vst.msk [vmem:[#allocation5 + $0x8] sm:$0xff] %vm904, %v895
        %907 = vst.msk [vmem:[#allocation5 + $0x10] sm:$0xff] %vm904, %v897
        %908 = vst.msk [vmem:[#allocation5 + $0x18] sm:$0xff] %vm904, %v899
        %v909 = vld [vmem:[%s818] sm:$0xff]
        %v910 = vld [vmem:[%s818 + $0x10] sm:$0xff]
        %v911 = vld [vmem:[%s818 + $0x20] sm:$0xff]
        %v912 = vld [vmem:[%s818 + $0x30] sm:$0xff]
        %v913 = vld [vmem:[%s818 + $0x40] sm:$0xff]
        %v914 = vld [vmem:[%s818 + $0x50] sm:$0xff]
        %v915 = vld [vmem:[%s818 + $0x60] sm:$0xff]
        %v916 = vld [vmem:[%s818 + $0x70] sm:$0xff]
        %v917 = vpack.c.bf16 %v910, %v909
        %v918 = vpack.c.bf16 %v912, %v911
        %v919 = vpack.c.bf16 %v914, %v913
        %v920 = vpack.c.bf16 %v916, %v915
        %925 = vrot.lane.b32.xlu0 %v917, 24
        %v926 = vpop.permute.xlu0 %925
        %927 = vrot.lane.b32.xlu0 %v918, 24
        %v928 = vpop.permute.xlu0 %927
        %929 = vrot.lane.b32.xlu0 %v919, 24
        %v930 = vpop.permute.xlu0 %929
        %931 = vrot.lane.b32.xlu0 %v920, 24
        %v932 = vpop.permute.xlu0 %931
        %vm937 = vcmask 261312
        %938 = vst.msk [vmem:[#allocation5] sm:$0xff] %vm937, %v926
        %939 = vst.msk [vmem:[#allocation5 + $0x8] sm:$0xff] %vm937, %v928
        %940 = vst.msk [vmem:[#allocation5 + $0x10] sm:$0xff] %vm937, %v930
        %941 = vst.msk [vmem:[#allocation5 + $0x18] sm:$0xff] %vm937, %v932
        %v942 = vld [vmem:[%s818 + $0x1] sm:$0xff]
        %v943 = vld [vmem:[%s818 + $0x11] sm:$0xff]
        %v944 = vld [vmem:[%s818 + $0x21] sm:$0xff]
        %v945 = vld [vmem:[%s818 + $0x31] sm:$0xff]
        %v946 = vld [vmem:[%s818 + $0x41] sm:$0xff]
        %v947 = vld [vmem:[%s818 + $0x51] sm:$0xff]
        %v948 = vld [vmem:[%s818 + $0x61] sm:$0xff]
        %v949 = vld [vmem:[%s818 + $0x71] sm:$0xff]
        %v950 = vpack.c.bf16 %v943, %v942
        %v951 = vpack.c.bf16 %v945, %v944
        %v952 = vpack.c.bf16 %v947, %v946
        %v953 = vpack.c.bf16 %v949, %v948
        %958 = vrot.lane.b32.xlu0 %v950, 32
        %v959 = vpop.permute.xlu0 %958
        %960 = vrot.lane.b32.xlu0 %v951, 32
        %v961 = vpop.permute.xlu0 %960
        %962 = vrot.lane.b32.xlu0 %v952, 32
        %v963 = vpop.permute.xlu0 %962
        %964 = vrot.lane.b32.xlu0 %v953, 32
        %v965 = vpop.permute.xlu0 %964
        %vm970 = vcmask 326912
        %971 = vst.msk [vmem:[#allocation5] sm:$0xff] %vm970, %v959
        %972 = vst.msk [vmem:[#allocation5 + $0x8] sm:$0xff] %vm970, %v961
        %973 = vst.msk [vmem:[#allocation5 + $0x10] sm:$0xff] %vm970, %v963
        %974 = vst.msk [vmem:[#allocation5 + $0x18] sm:$0xff] %vm970, %v965
        %v975 = vld [vmem:[%s818 + $0x2] sm:$0xff]
        %v976 = vld [vmem:[%s818 + $0x12] sm:$0xff]
        %v977 = vld [vmem:[%s818 + $0x22] sm:$0xff]
        %v978 = vld [vmem:[%s818 + $0x32] sm:$0xff]
        %v979 = vld [vmem:[%s818 + $0x42] sm:$0xff]
        %v980 = vld [vmem:[%s818 + $0x52] sm:$0xff]
        %v981 = vld [vmem:[%s818 + $0x62] sm:$0xff]
        %v982 = vld [vmem:[%s818 + $0x72] sm:$0xff]
        %v983 = vpack.c.bf16 %v976, %v975
        %v984 = vpack.c.bf16 %v978, %v977
        %v985 = vpack.c.bf16 %v980, %v979
        %v986 = vpack.c.bf16 %v982, %v981
        %991 = vrot.lane.b32.xlu0 %v983, 40
        %v992 = vpop.permute.xlu0 %991
        %993 = vrot.lane.b32.xlu0 %v984, 40
        %v994 = vpop.permute.xlu0 %993
        %995 = vrot.lane.b32.xlu0 %v985, 40
        %v996 = vpop.permute.xlu0 %995
        %997 = vrot.lane.b32.xlu0 %v986, 40
        %v998 = vpop.permute.xlu0 %997
        %vm1003 = vcmask 392512
        %1004 = vst.msk [vmem:[#allocation5] sm:$0xff] %vm1003, %v992
        %1005 = vst.msk [vmem:[#allocation5 + $0x8] sm:$0xff] %vm1003, %v994
        %1006 = vst.msk [vmem:[#allocation5 + $0x10] sm:$0xff] %vm1003, %v996
        %1007 = vst.msk [vmem:[#allocation5 + $0x18] sm:$0xff] %vm1003, %v998
        %s1008 = scalar_lea.vmem [#allocation4], 32
        %v1009 = vld [vmem:[%s1008] sm:$0xff]
        %v1010 = vld [vmem:[%s1008 + $0x10] sm:$0xff]
        %v1011 = vld [vmem:[%s1008 + $0x20] sm:$0xff]
        %v1012 = vld [vmem:[%s1008 + $0x30] sm:$0xff]
        %v1013 = vld [vmem:[%s1008 + $0x40] sm:$0xff]
        %v1014 = vld [vmem:[%s1008 + $0x50] sm:$0xff]
        %v1015 = vld [vmem:[%s1008 + $0x60] sm:$0xff]
        %v1016 = vld [vmem:[%s1008 + $0x70] sm:$0xff]
        %v1017 = vpack.c.bf16 %v1010, %v1009
        %v1018 = vpack.c.bf16 %v1012, %v1011
        %v1019 = vpack.c.bf16 %v1014, %v1013
        %v1020 = vpack.c.bf16 %v1016, %v1015
        %1025 = vrot.lane.b32.xlu0 %v1017, 48
        %v1026 = vpop.permute.xlu0 %1025
        %1027 = vrot.lane.b32.xlu0 %v1018, 48
        %v1028 = vpop.permute.xlu0 %1027
        %1029 = vrot.lane.b32.xlu0 %v1019, 48
        %v1030 = vpop.permute.xlu0 %1029
        %1031 = vrot.lane.b32.xlu0 %v1020, 48
        %v1032 = vpop.permute.xlu0 %1031
        %vm1037 = vcmask 458112
        %1038 = vst.msk [vmem:[#allocation5] sm:$0xff] %vm1037, %v1026
        %1039 = vst.msk [vmem:[#allocation5 + $0x8] sm:$0xff] %vm1037, %v1028
        %1040 = vst.msk [vmem:[#allocation5 + $0x10] sm:$0xff] %vm1037, %v1030
        %1041 = vst.msk [vmem:[#allocation5 + $0x18] sm:$0xff] %vm1037, %v1032
        %v1042 = vld [vmem:[%s1008 + $0x1] sm:$0xff]
        %v1043 = vld [vmem:[%s1008 + $0x11] sm:$0xff]
        %v1044 = vld [vmem:[%s1008 + $0x21] sm:$0xff]
        %v1045 = vld [vmem:[%s1008 + $0x31] sm:$0xff]
        %v1046 = vld [vmem:[%s1008 + $0x41] sm:$0xff]
        %v1047 = vld [vmem:[%s1008 + $0x51] sm:$0xff]
        %v1048 = vld [vmem:[%s1008 + $0x61] sm:$0xff]
        %v1049 = vld [vmem:[%s1008 + $0x71] sm:$0xff]
        %v1050 = vpack.c.bf16 %v1043, %v1042
        %v1051 = vpack.c.bf16 %v1045, %v1044
        %v1052 = vpack.c.bf16 %v1047, %v1046
        %v1053 = vpack.c.bf16 %v1049, %v1048
        %1058 = vrot.lane.b32.xlu0 %v1050, 56
        %v1059 = vpop.permute.xlu0 %1058
        %1060 = vrot.lane.b32.xlu0 %v1051, 56
        %v1061 = vpop.permute.xlu0 %1060
        %1062 = vrot.lane.b32.xlu0 %v1052, 56
        %v1063 = vpop.permute.xlu0 %1062
        %1064 = vrot.lane.b32.xlu0 %v1053, 56
        %v1065 = vpop.permute.xlu0 %1064
        %vm1070 = vcmask 523712
        %1071 = vst.msk [vmem:[#allocation5] sm:$0xff] %vm1070, %v1059
        %1072 = vst.msk [vmem:[#allocation5 + $0x8] sm:$0xff] %vm1070, %v1061
        %1073 = vst.msk [vmem:[#allocation5 + $0x10] sm:$0xff] %vm1070, %v1063
        %1074 = vst.msk [vmem:[#allocation5 + $0x18] sm:$0xff] %vm1070, %v1065
        %v1075 = vld [vmem:[%s1008 + $0x2] sm:$0xff]
        %v1076 = vld [vmem:[%s1008 + $0x12] sm:$0xff]
        %v1077 = vld [vmem:[%s1008 + $0x22] sm:$0xff]
        %v1078 = vld [vmem:[%s1008 + $0x32] sm:$0xff]
        %v1079 = vld [vmem:[%s1008 + $0x42] sm:$0xff]
        %v1080 = vld [vmem:[%s1008 + $0x52] sm:$0xff]
        %v1081 = vld [vmem:[%s1008 + $0x62] sm:$0xff]
        %v1082 = vld [vmem:[%s1008 + $0x72] sm:$0xff]
        %v1083 = vpack.c.bf16 %v1076, %v1075
        %v1084 = vpack.c.bf16 %v1078, %v1077
        %v1085 = vpack.c.bf16 %v1080, %v1079
        %v1086 = vpack.c.bf16 %v1082, %v1081
        %1091 = vrot.lane.b32.xlu0 %v1083, 64
        %v1092 = vpop.permute.xlu0 %1091
        %1093 = vrot.lane.b32.xlu0 %v1084, 64
        %v1094 = vpop.permute.xlu0 %1093
        %1095 = vrot.lane.b32.xlu0 %v1085, 64
        %v1096 = vpop.permute.xlu0 %1095
        %1097 = vrot.lane.b32.xlu0 %v1086, 64
        %v1098 = vpop.permute.xlu0 %1097
        %vm1103 = vcmask 589312
        %1104 = vst.msk [vmem:[#allocation5] sm:$0xff] %vm1103, %v1092
        %1105 = vst.msk [vmem:[#allocation5 + $0x8] sm:$0xff] %vm1103, %v1094
        %1106 = vst.msk [vmem:[#allocation5 + $0x10] sm:$0xff] %vm1103, %v1096
        %1107 = vst.msk [vmem:[#allocation5 + $0x18] sm:$0xff] %vm1103, %v1098
        %v1108 = vld [vmem:[#allocation5] sm:$0xff]
        %v1109 = vld [vmem:[#allocation5 + $0x8] sm:$0xff]
        %v1110 = vld [vmem:[#allocation5 + $0x10] sm:$0xff]
        %v1111 = vld [vmem:[#allocation5 + $0x18] sm:$0xff]
        %v1112 = vld [vmem:[%s3] sm:$0xf]
        %v1113 = vld [vmem:[%s3 + $0x4] sm:$0xf]
        %v1114 = vld [vmem:[%s3 + $0x8] sm:$0xf]
        %v1115 = vld [vmem:[%s3 + $0xc] sm:$0xf]
        %v1116 = vld [vmem:[%s3 + $0x10] sm:$0xf]
        %v1117 = vld [vmem:[%s3 + $0x14] sm:$0xf]
        %v1118 = vld [vmem:[%s3 + $0x18] sm:$0xf]
        %v1119 = vld [vmem:[%s3 + $0x1c] sm:$0xf]
        %v1120 = vld [vmem:[%s3 + $0x20] sm:$0xf]
        %v1121 = vld [vmem:[%s4] sm:$0x1]
        %v1123 = vlaneseq
        %v1124 = vshrl.u32 %v1123, 7
        %v1125 = vsub.s32 0, %v1124
        %v1126 = vrot.slane %v1121, %v1125
        %v1137 = vunpack.c.l.b16 %v1112
        %v1138 = vunpack.c.l.b16 %v1113
        %v1139 = vunpack.c.l.b16 %v1114
        %v1140 = vunpack.c.l.b16 %v1115
        %v1141 = vunpack.c.l.b16 %v1116
        %v1142 = vunpack.c.l.b16 %v1117
        %v1143 = vunpack.c.l.b16 %v1118
        %v1144 = vunpack.c.l.b16 %v1119
        %v1145 = vunpack.c.l.b16 %v1120
        %v1146 = vpack.c.b16 %v1138, %v1137
        %v1147 = vpack.c.b16 %v1140, %v1139
        %v1148 = vpack.c.b16 %v1142, %v1141
        %v1149 = vpack.c.b16 %v1144, %v1143
        %v1150 = vpack.c.b16 %v1145, %v1145
        %vm1155 = vcmask 588800
        %v1157 = vsel %vm1155, %v1108, 0
        %v1160 = vsel %vm1155, %v1109, 0
        %v1163 = vsel %vm1155, %v1110, 0
        %v1166 = vsel %vm1155, %v1111, 0
        %vm1168 = vcmask 1043456
        %v1170 = vsel %vm1168, %v1150, 0
        %1172 = vmatprep.subr.bf16.mxu0 0
        %1173 = vmatpush1.bf16.msra.mxu0 %v1146
        %1174 = vmatprep.subr.bf16.mxu0 0
        %1175 = vmatpush1.bf16.msra.mxu0 %v1147
        %1176 = vmatprep.subr.bf16.mxu0 0
        %1177 = vmatpush1.bf16.msra.mxu0 %v1148
        %1178 = vmatprep.subr.bf16.mxu0 0
        %1179 = vmatpush1.bf16.msra.mxu0 %v1149
        %1180 = vmatprep.subr.bf16.mxu0 0
        %1181 = vmatpush1.bf16.msra.mxu0 %v1170
        %1182 = vmatprep.subr.bf16.mxu0 0
        %1183 = vmatpush1.bf16.msra.mxu0 0
        %1184 = vmatprep.subr.bf16.mxu0 0
        %1185 = vmatpush1.bf16.msra.mxu0 0
        %1186 = vmatprep.subr.bf16.mxu0 0
        %1187 = vmatpush1.bf16.msra.mxu0 0
        %1188 = vmatprep.subr.bf16.mxu0 0
        %1189 = vmatpush1.bf16.msra.mxu0 0
        %1190 = vmatprep.subr.bf16.mxu0 0
        %1191 = vmatpush1.bf16.msra.mxu0 0
        %1192 = vmatprep.subr.bf16.mxu0 0
        %1193 = vmatpush1.bf16.msra.mxu0 0
        %1194 = vmatprep.subr.bf16.mxu0 0
        %1195 = vmatpush1.bf16.msra.mxu0 0
        %1196 = vmatprep.subr.bf16.mxu0 0
        %1197 = vmatpush1.bf16.msra.mxu0 0
        %1198 = vmatprep.subr.bf16.mxu0 0
        %1199 = vmatpush1.bf16.msra.mxu0 0
        %1200 = vmatprep.subr.bf16.mxu0 0
        %1201 = vmatpush1.bf16.msra.mxu0 0
        %1202 = vmatprep.subr.bf16.mxu0 0
        %1203 = vmatpush1.bf16.msra.mxu0 0
        %1204 = vmatprep.mubr.bf16.mxu0 0
        %1205 = vmatmul.mubr.bf16.gmra.mrb[0].mxu0 %v1157
        %v1206 = vpop.f32.mrb[0].mxu0
        %v1207 = vadd.f32 %v1126, %v1206
        %v1208 = vpop.f32.mrb[0].mxu0
        %v1209 = vpop.f32.mrb[0].mxu0
        %v1210 = vadd.f32 %v1126, %v1209
        %v1211 = vpop.f32.mrb[0].mxu0
        %1212 = vmatprep.mubr.bf16.mxu0 0
        %1213 = vmatmul.mubr.bf16.gmra.mrb[0].mxu0 %v1160
        %v1214 = vpop.f32.mrb[0].mxu0
        %v1215 = vadd.f32 %v1126, %v1214
        %v1216 = vpop.f32.mrb[0].mxu0
        %v1217 = vpop.f32.mrb[0].mxu0
        %v1218 = vadd.f32 %v1126, %v1217
        %v1219 = vpop.f32.mrb[0].mxu0
        %1220 = vmatprep.mubr.bf16.mxu0 0
        %1221 = vmatmul.mubr.bf16.gmra.mrb[0].mxu0 %v1163
        %v1222 = vpop.f32.mrb[0].mxu0
        %v1223 = vadd.f32 %v1126, %v1222
        %v1224 = vpop.f32.mrb[0].mxu0
        %v1225 = vpop.f32.mrb[0].mxu0
        %v1226 = vadd.f32 %v1126, %v1225
        %v1227 = vpop.f32.mrb[0].mxu0
        %1228 = vmatprep.mubr.bf16.mxu0 0
        %1229 = vmatmul.mubr.bf16.gmra.mrb[0].mxu0 %v1166
        %v1230 = vpop.f32.mrb[0].mxu0
        %v1231 = vadd.f32 %v1126, %v1230
        %v1232 = vpop.f32.mrb[0].mxu0
        %v1233 = vpop.f32.mrb[0].mxu0
        %v1234 = vadd.f32 %v1126, %v1233
        %v1235 = vpop.f32.mrb[0].mxu0
        %1236 = vdwg.mxu0
        %v1237 = vmax.f32 %v1207, 0.0
        %v1238 = vmax.f32 %v1210, 0.0
        %v1239 = vmax.f32 %v1215, 0.0
        %v1240 = vmax.f32 %v1218, 0.0
        %v1241 = vmax.f32 %v1223, 0.0
        %v1242 = vmax.f32 %v1226, 0.0
        %v1243 = vmax.f32 %v1231, 0.0
        %v1244 = vmax.f32 %v1234, 0.0
        %1245 = vst.msk [vmem:[%s244] sm:$0xff] %vm379, %v1237
        %1246 = vst.msk [vmem:[%s244 + $0x8] sm:$0xff] %vm379, %v1238
        %1247 = vst.msk [vmem:[%s244 + $0x10] sm:$0xff] %vm379, %v1239
        %1248 = vst.msk [vmem:[%s244 + $0x18] sm:$0xff] %vm379, %v1240
        %1249 = vst.msk [vmem:[%s244 + $0x20] sm:$0xff] %vm379, %v1241
        %1250 = vst.msk [vmem:[%s244 + $0x28] sm:$0xff] %vm379, %v1242
        %1251 = vst.msk [vmem:[%s244 + $0x30] sm:$0xff] %vm379, %v1243
        %1252 = vst.msk [vmem:[%s244 + $0x38] sm:$0xff] %vm379, %v1244
        %p1253 = scmp.lt.s32.totalorder %s19, 1
        %s1254 = scalar_select %p1253, %s19, 1
        %s1255 = smul.addr %s1254, 8
        %s1256 = smul.addr %s1255, 8
        %s1257 = scalar_lea.vmem %s5, %s1256
        // Predicated region
        $region45: #{tpu_custom_call.1} parent=39 // pred_check
          %p1258 = pneg %p147
        $region46: #{tpu_custom_call.1} parent=39 // pred_check_branch
          %1260 = sbr.rel (%p1258) target = $region48
        $region47: #{tpu_custom_call.1} parent=39 // pred_region
          _
        $region48: #{tpu_custom_call.1} parent=39 // pred_fallthru
          _
      $region40: #{tpu_custom_call.1} parent=5 // pred_fallthru
        _
      %p1261 = scmp.le.s32.totalorder 2, %s14
      // Predicated region
      $region49: #{tpu_custom_call.1} parent=5 // pred_check
        %p1262 = pneg %p1261
      $region50: #{tpu_custom_call.1} parent=5 // pred_check_branch
        %1264 = sbr.rel (%p1262) target = $region52
      $region51: #{tpu_custom_call.1} parent=5 // pred_region
        %s1265 = ssub.s32 %s14, 2
        // Predicated region
        $region53: #{tpu_custom_call.1} parent=51 // pred_check
          %p1266 = pneg %p153
        $region54: #{tpu_custom_call.1} parent=51 // pred_check_branch
          %1268 = sbr.rel (%p1266) target = $region56
        $region55: #{tpu_custom_call.1} parent=51 // pred_region
          %p1269 = scmp.lt.s32.totalorder %s20, 1
          %s1270 = scalar_select %p1269, %s20, 1
          %s1271 = smul.addr %s1270, 8
          %s1272 = smul.addr %s1271, 8
          %s1273 = scalar_lea.vmem %s5, %s1272
        $region56: #{tpu_custom_call.1} parent=51 // pred_fallthru
          _
      $region52: #{tpu_custom_call.1} parent=5 // pred_fallthru
        _
    $region6: #{tpu_custom_call.1} parent=1 // loop_footer
      %s18 = sadd.s32 1, %s14
    $region7: #{tpu_custom_call.1} parent=1 // loop_footer_branch
      %13 = sbr.rel target = $region3
    $region8: #{tpu_custom_call.1} parent=1 // loop_exit
      _
    %1274 = vsyncpa [#allocation7], 1
    %s1275 = scalar_lea.sflag [#allocation7], 1
    %1276 = vsyncpa %s1275, 1

</llo_original>
